<compile_context>
chip_gen: v7x
topology: tpu7x:2x2x1
jax: 0.10.0
libtpu: 0.0.40
codegen_flags: <defaults>
</compile_context>

<pallas_src>
import functools

import jax
import jax.numpy as jnp
from jax.experimental import pallas as pl
from jax.experimental.pallas import tpu as pltpu


def _round_up(x, m):
    return ((x + m - 1) // m) * m


def _physical_vmem_bytes():
    """Best-effort physical VMEM query; conservative (v7x) default on failure."""
    get_info = getattr(pltpu, "get_tpu_info", None)
    if get_info is not None:
        try:
            info = get_info()
            for attr in ("vmem_capacity_bytes", "vmem_size_bytes", "vmem_bytes"):
                v = getattr(info, attr, None)
                if v:
                    return int(v)
        except Exception:
            pass
    return 64 << 20  # v7x has 64 MiB per TensorCore; safe lower bound.


def _prefer_bf16_tanh():
    """bf16 EUP exists on v6e / v7x; on v5e and older keep tanh in f32."""
    try:
        kind = jax.devices()[0].device_kind.lower()
    except Exception:
        return False
    if "tpu" not in kind:
        return False
    return not any(v in kind for v in ("v2", "v3", "v4", "v5"))


def _resident_spec_factory():
    """BlockSpec factory for grid-invariant (weight) operands.

    Weights are never re-fetched (constant index_map), so double buffering only
    wastes VMEM -> request a single buffer when pipeline_mode is available.
    Returns (factory, buffer_count_used_for_vmem_accounting)."""
    buffered = getattr(pl, "Buffered", None)
    if buffered is not None:
        try:
            # Probe: older JAX versions may not accept pipeline_mode.
            pl.BlockSpec((8, 128), lambda i: (0, 0), pipeline_mode=buffered(1))

            def make(shape):
                n = len(shape)
                return pl.BlockSpec(shape, lambda i: (0,) * n,
                                    pipeline_mode=buffered(1))

            return make, 1
        except Exception:
            pass

    def make(shape):
        n = len(shape)
        return pl.BlockSpec(shape, lambda i: (0,) * n)

    return make, 2


def _hs_efnn_kernel(num_layers, P, tanh_bf16, s0_ref,
                    ew1_ref, eb1_ref, ew2_ref, eb2_ref,
                    qw1_ref, qb1_ref, qw2_ref, qb2_ref,
                    out_ref):
    """One batch tile per grid step. Weights are resident full blocks.

    Shapes (P = padded feature width, L = num_layers, TB = batch tile):
      s0_ref : (TB, P)      f32
      ew1/ew2/qw2 : (L, P, P) bf16 ;  eb1/eb2/qb2 : (L, 1, P) f32
      qw1 : (P, L*P) bf16 ;  qb1 : (1, L*P) f32
      out_ref : (1, TB)     f32   (lane-dense row of per-sample energies)
    """
    S0 = s0_ref[...]                               # (TB, P) f32
    S0_bf = S0.astype(jnp.bfloat16)

    def act(x):
        # bf16 tanh uses the bf16 EUP path on v6e/v7x; result feeds a bf16 dot anyway.
        if tanh_bf16:
            return jnp.tanh(x.astype(jnp.bfloat16))
        return jnp.tanh(x).astype(jnp.bfloat16)

    # --- quasi-particle first linears: depend only on S0 -> fused wide matmul ---
    hq_bf = act(
        jnp.dot(S0_bf, qw1_ref[...], preferred_element_type=jnp.float32)
        + qb1_ref[...])                            # (TB, L*P) bf16

    # --- effective-field chain (strictly serial); Q computed lazily per layer ---
    # TODO(synk): for num_layers >~ 8, switch to lax.fori_loop over the stacked
    # (L, P, P) refs to bound code size / live ranges (kept unrolled for small L).
    S = S0
    for i in range(num_layers):
        h_bf = act(
            jnp.dot(S.astype(jnp.bfloat16), ew1_ref[i],
                    preferred_element_type=jnp.float32) + eb1_ref[i])
        F = jnp.dot(h_bf, ew2_ref[i],
                    preferred_element_type=jnp.float32) + eb2_ref[i]
        Q = jnp.dot(hq_bf[:, i * P:(i + 1) * P], qw2_ref[i],
                    preferred_element_type=jnp.float32) + qb2_ref[i]
        S = Q * F                                  # (TB, P) f32

    # E = S.sum(dim=1); padded feature columns are exactly 0.
    # Store as a lane-dense (1, TB) row (relayout rides the idle XLU slot).
    out_ref[...] = jnp.sum(S, axis=1)[None, :]


def _prepare_params(params, P):
    """Pad to (P, P)/(1, P), stack per-layer, cast weights to bf16.

    params: flat list [ew1, eb1, ew2, eb2, qw1, qb1, qw2, qb2] * L with weights
    already transposed to (in, out) and biases shaped (1, out)."""
    L = len(params) // 8

    def pad_w(w):
        return jnp.zeros((P, P), jnp.float32).at[:w.shape[0], :w.shape[1]].set(w)

    def pad_b(b):
        return jnp.zeros((1, P), jnp.float32).at[:, :b.shape[1]].set(b)

    ew1 = jnp.stack([pad_w(params[8 * i + 0]) for i in range(L)]).astype(jnp.bfloat16)
    eb1 = jnp.stack([pad_b(params[8 * i + 1]) for i in range(L)])
    ew2 = jnp.stack([pad_w(params[8 * i + 2]) for i in range(L)]).astype(jnp.bfloat16)
    eb2 = jnp.stack([pad_b(params[8 * i + 3]) for i in range(L)])
    qw1 = jnp.concatenate([pad_w(params[8 * i + 4]) for i in range(L)],
                          axis=1).astype(jnp.bfloat16)            # (P, L*P)
    qb1 = jnp.concatenate([pad_b(params[8 * i + 5]) for i in range(L)], axis=1)  # (1, L*P)
    qw2 = jnp.stack([pad_w(params[8 * i + 6]) for i in range(L)]).astype(jnp.bfloat16)
    qb2 = jnp.stack([pad_b(params[8 * i + 7]) for i in range(L)])
    return ew1, eb1, ew2, eb2, qw1, qb1, qw2, qb2


def hs_efnn_forward(S0, params, *, block_batch=512, tanh_in_bf16=None):
    """S0: (batch, num_spins) f32.  params: flat list of 8 arrays per layer:
    [ew1, eb1, ew2, eb2, qw1, qb1, qw2, qb2] * num_layers, weights (in, out),
    biases (1, out).  Returns (batch, 1) f32 energies."""
    num_layers = len(params) // 8
    batch, num_spins = S0.shape
    num_neurons = params[1].shape[1]

    # Common lane-padded feature width (>=128, multiple of 128).
    P = _round_up(max(num_spins, num_neurons), 128)
    L = num_layers
    ew1, eb1, ew2, eb2, qw1, qb1, qw2, qb2 = _prepare_params(params, P)

    if tanh_in_bf16 is None:
        tanh_in_bf16 = _prefer_bf16_tanh()

    resident_spec, weight_bufs = _resident_spec_factory()

    # --- VMEM budgeting (chip-aware) ----------------------------------------
    phys = _physical_vmem_bytes()
    vmem_limit = max(32 << 20, min(phys - (16 << 20), 100 << 20))
    weight_bytes = weight_bufs * (
        4 * L * P * P * 2        # ew1, ew2, qw2 (L,P,P) + qw1 (P,L*P), bf16
        + 4 * L * P * 4)         # eb1, eb2, qb2 (L,1,P) + qb1 (1,L*P), f32
    per_row_bytes = P * (46 + 6 * L)   # rough per-batch-row VMEM (tiles + temporaries)
    tb_budget = (vmem_limit - weight_bytes - (4 << 20)) // per_row_bytes
    if tb_budget < 16:
        # TODO(synk): stream the (L, P, P) weight stacks layer-by-layer
        # (pltpu.emit_pipeline / manual double buffer) instead of keeping them resident.
        raise ValueError(
            f"Resident weights (~{weight_bytes >> 20} MiB) leave no VMEM for a "
            f"batch tile within the {vmem_limit >> 20} MiB limit.")

    # --- batch tile: as big as the budget allows, multiple of 16 (bf16 packing);
    #     when several tiles are needed, force a multiple of 128 so the output
    #     row blocks stay lane-aligned. ---------------------------------------
    tb_req = _round_up(batch, 16)
    tb_cap = min(block_batch, int(tb_budget))
    if tb_req <= tb_cap:
        tb = tb_req                                   # single tile covers the batch
    else:
        tb = max(128, (tb_cap // 128) * 128)
    batch_pad = _round_up(batch, tb)
    num_tiles = batch_pad // tb

    S0_p = jnp.zeros((batch_pad, P), jnp.float32).at[:batch, :num_spins].set(
        S0.astype(jnp.float32))

    kernel = functools.partial(_hs_efnn_kernel, num_layers, P, bool(tanh_in_bf16))

    out = pl.pallas_call(
        kernel,
        out_shape=jax.ShapeDtypeStruct((1, batch_pad), jnp.float32),
        grid=(num_tiles,),
        in_specs=[
            pl.BlockSpec((tb, P), lambda i: (i, 0)),              # S0 tile (pipelined)
            resident_spec((L, P, P)), resident_spec((L, 1, P)),   # ew1, eb1 (resident)
            resident_spec((L, P, P)), resident_spec((L, 1, P)),   # ew2, eb2 (resident)
            resident_spec((P, L * P)), resident_spec((1, L * P)), # qw1, qb1 (resident)
            resident_spec((L, P, P)), resident_spec((L, 1, P)),   # qw2, qb2 (resident)
        ],
        out_specs=pl.BlockSpec((1, tb), lambda i: (0, i)),        # lane-dense row
        compiler_params=pltpu.CompilerParams(
            dimension_semantics=("parallel",),                    # megacore sharding
            vmem_limit_bytes=int(vmem_limit),
        ),
    )(S0_p, ew1, eb1, ew2, eb2, qw1, qb1, qw2, qb2)

    return out.reshape(batch_pad, 1)[:batch]


def init_params(key, num_spins, num_layers, num_neurons):
    """Deterministic PyTorch-style init (uniform(-1/sqrt(fan_in), +1/sqrt(fan_in))).
    Weights are stored transposed: shape (in, out). Biases: shape (1, out)."""
    params = []
    for i in range(1, num_layers + 1):
        eff_in = num_spins if i == 1 else num_neurons
        dims = [
            (eff_in, num_neurons),       # effective field linear 1
            (num_neurons, num_neurons),  # effective field linear 2
            (num_spins, num_neurons),    # quasi particle linear 1
            (num_neurons, num_neurons),  # quasi particle linear 2
        ]
        layer_params = []
        for (fan_in, fan_out) in dims:
            key, kw, kb = jax.random.split(key, 3)
            bound = 1.0 / (fan_in ** 0.5)
            w = jax.random.uniform(kw, (fan_in, fan_out), jnp.float32, -bound, bound)
            b = jax.random.uniform(kb, (1, fan_out), jnp.float32, -bound, bound)
            layer_params.extend([w, b])
        # order: ew1, eb1, ew2, eb2, qw1, qb1, qw2, qb2
        params.extend(layer_params)
    return params


def reference_forward(S0, params, mxu_dtype=None, tanh_dtype=None):
    """Plain-JAX reference on the ORIGINAL (unpadded) params.
    mxu_dtype=jnp.bfloat16 mirrors the kernel's dot-input precision; tanh_dtype
    mirrors the kernel's tanh evaluation precision."""
    num_layers = len(params) // 8

    def lin(x, w, b):
        if mxu_dtype is not None:
            x = x.astype(mxu_dtype)
            w = w.astype(mxu_dtype)
        return jnp.dot(x, w, preferred_element_type=jnp.float32) + b

    def act(x):
        if tanh_dtype is not None:
            return jnp.tanh(x.astype(tanh_dtype))
        return jnp.tanh(x)

    S = S0
    for i in range(num_layers):
        ew1, eb1, ew2, eb2, qw1, qb1, qw2, qb2 = params[8 * i: 8 * (i + 1)]
        F = lin(act(lin(S, ew1, eb1)), ew2, eb2)
        Q = lin(act(lin(S0, qw1, qb1)), qw2, qb2)
        S = Q * F
    return jnp.sum(S, axis=1, keepdims=True)


if __name__ == "__main__":
    batch = 10          # deliberately not a multiple of 8/16 to exercise batch padding
    num_spins = 16
    num_layers = 3
    num_neurons = 32

    key = jax.random.PRNGKey(0)
    key, k_in = jax.random.split(key)
    # spin configurations in {-1, +1}
    S0 = jnp.where(
        jax.random.bernoulli(k_in, 0.5, (batch, num_spins)), 1.0, -1.0
    ).astype(jnp.float32)

    params = init_params(key, num_spins, num_layers, num_neurons)

    use_bf16_tanh = _prefer_bf16_tanh()
    E = hs_efnn_forward(S0, params, tanh_in_bf16=use_bf16_tanh)
    E = jax.block_until_ready(E)
    assert E.shape == (batch, 1)

    # Check against a reference that mirrors the kernel's MXU/tanh precision.
    E_mirror = reference_forward(
        S0, params, mxu_dtype=jnp.bfloat16,
        tanh_dtype=jnp.bfloat16 if use_bf16_tanh else None)
    assert jnp.allclose(E, E_mirror, atol=1e-2, rtol=1e-2)

    # Sanity check against the full-f32 reference (loose: bf16 quantization).
    E_f32_ref = reference_forward(S0, params)
    assert jnp.allclose(E, E_f32_ref, atol=1e-1, rtol=1e-1)

    print("KERNEL_OK")
</pallas_src>

<mosaic_0001>
module attributes {stable_mosaic.version = 11 : i64} {
  func.func @_hs_efnn_kernel(%arg0: i32, %arg1: memref<16x128xf32, #tpu.memory_space<vmem>>, %arg2: memref<3x128x128xbf16, #tpu.memory_space<vmem>>, %arg3: memref<3x1x128xf32, #tpu.memory_space<vmem>>, %arg4: memref<3x128x128xbf16, #tpu.memory_space<vmem>>, %arg5: memref<3x1x128xf32, #tpu.memory_space<vmem>>, %arg6: memref<128x384xbf16, #tpu.memory_space<vmem>>, %arg7: memref<1x384xf32, #tpu.memory_space<vmem>>, %arg8: memref<3x128x128xbf16, #tpu.memory_space<vmem>>, %arg9: memref<3x1x128xf32, #tpu.memory_space<vmem>>, %arg10: memref<1x16xf32, #tpu.memory_space<vmem>>) attributes {dimension_semantics = [#tpu.dimension_semantics<parallel>], iteration_bounds = array<i64: 1>, scalar_prefetch = 0 : i64, scratch_operands = 0 : i64, tpu.core_type = #tpu.core_type<tc>, window_params = [{transform_indices = @transform_0, window_bounds = array<i64: 16, 128>}, {pipeline_mode = #tpu.pipeline_mode<synchronous>, transform_indices = @transform_1, window_bounds = array<i64: 3, 128, 128>}, {pipeline_mode = #tpu.pipeline_mode<synchronous>, transform_indices = @transform_2, window_bounds = array<i64: 3, 1, 128>}, {pipeline_mode = #tpu.pipeline_mode<synchronous>, transform_indices = @transform_3, window_bounds = array<i64: 3, 128, 128>}, {pipeline_mode = #tpu.pipeline_mode<synchronous>, transform_indices = @transform_4, window_bounds = array<i64: 3, 1, 128>}, {pipeline_mode = #tpu.pipeline_mode<synchronous>, transform_indices = @transform_5, window_bounds = array<i64: 128, 384>}, {pipeline_mode = #tpu.pipeline_mode<synchronous>, transform_indices = @transform_6, window_bounds = array<i64: 1, 384>}, {pipeline_mode = #tpu.pipeline_mode<synchronous>, transform_indices = @transform_7, window_bounds = array<i64: 3, 128, 128>}, {pipeline_mode = #tpu.pipeline_mode<synchronous>, transform_indices = @transform_8, window_bounds = array<i64: 3, 1, 128>}, {transform_indices = @transform_9, window_bounds = array<i64: 1, 16>}]} {
    %c0 = arith.constant 0 : index
    %c0_0 = arith.constant 0 : index
    %0 = vector.load %arg1[%c0, %c0_0] : memref<16x128xf32, #tpu.memory_space<vmem>>, vector<16x128xf32>
    %1 = arith.truncf %0 : vector<16x128xf32> to vector<16x128xbf16>
    %c0_1 = arith.constant 0 : index
    %c0_2 = arith.constant 0 : index
    %2 = vector.load %arg6[%c0_1, %c0_2] : memref<128x384xbf16, #tpu.memory_space<vmem>>, vector<128x384xbf16>
    %cst = arith.constant dense<0.000000e+00> : vector<16x384xf32>
    %3 = tpu.matmul %1, %2, %cst {dimension_numbers = #tpu.dot_dimension_numbers<[1], [0], [0], [1], [0, 0, 1, 1], [], []>} : vector<16x128xbf16>, vector<128x384xbf16>, vector<16x384xf32> -> vector<16x384xf32>
    %c0_3 = arith.constant 0 : index
    %c0_4 = arith.constant 0 : index
    %4 = vector.load %arg7[%c0_3, %c0_4] : memref<1x384xf32, #tpu.memory_space<vmem>>, vector<1x384xf32>
    %5 = vector.broadcast %4 : vector<1x384xf32> to vector<16x384xf32>
    %6 = arith.addf %3, %5 : vector<16x384xf32>
    %7 = math.tanh %6 : vector<16x384xf32>
    %8 = arith.truncf %7 : vector<16x384xf32> to vector<16x384xbf16>
    %9 = arith.truncf %0 : vector<16x128xf32> to vector<16x128xbf16>
    %c0_5 = arith.constant 0 : index
    %c0_6 = arith.constant 0 : index
    %c0_7 = arith.constant 0 : index
    %10 = vector.load %arg2[%c0_5, %c0_6, %c0_7] : memref<3x128x128xbf16, #tpu.memory_space<vmem>>, vector<1x128x128xbf16>
    %11 = vector.shape_cast %10 : vector<1x128x128xbf16> to vector<128x128xbf16>
    %cst_8 = arith.constant dense<0.000000e+00> : vector<16x128xf32>
    %12 = tpu.matmul %9, %11, %cst_8 {dimension_numbers = #tpu.dot_dimension_numbers<[1], [0], [0], [1], [0, 0, 1, 1], [], []>} : vector<16x128xbf16>, vector<128x128xbf16>, vector<16x128xf32> -> vector<16x128xf32>
    %c0_9 = arith.constant 0 : index
    %c0_10 = arith.constant 0 : index
    %c0_11 = arith.constant 0 : index
    %13 = vector.load %arg3[%c0_9, %c0_10, %c0_11] : memref<3x1x128xf32, #tpu.memory_space<vmem>>, vector<1x1x128xf32>
    %14 = vector.shape_cast %13 : vector<1x1x128xf32> to vector<1x128xf32>
    %15 = vector.broadcast %14 : vector<1x128xf32> to vector<16x128xf32>
    %16 = arith.addf %12, %15 : vector<16x128xf32>
    %17 = math.tanh %16 : vector<16x128xf32>
    %18 = arith.truncf %17 : vector<16x128xf32> to vector<16x128xbf16>
    %c0_12 = arith.constant 0 : index
    %c0_13 = arith.constant 0 : index
    %c0_14 = arith.constant 0 : index
    %19 = vector.load %arg4[%c0_12, %c0_13, %c0_14] : memref<3x128x128xbf16, #tpu.memory_space<vmem>>, vector<1x128x128xbf16>
    %20 = vector.shape_cast %19 : vector<1x128x128xbf16> to vector<128x128xbf16>
    %cst_15 = arith.constant dense<0.000000e+00> : vector<16x128xf32>
    %21 = tpu.matmul %18, %20, %cst_15 {dimension_numbers = #tpu.dot_dimension_numbers<[1], [0], [0], [1], [0, 0, 1, 1], [], []>} : vector<16x128xbf16>, vector<128x128xbf16>, vector<16x128xf32> -> vector<16x128xf32>
    %c0_16 = arith.constant 0 : index
    %c0_17 = arith.constant 0 : index
    %c0_18 = arith.constant 0 : index
    %22 = vector.load %arg5[%c0_16, %c0_17, %c0_18] : memref<3x1x128xf32, #tpu.memory_space<vmem>>, vector<1x1x128xf32>
    %23 = vector.shape_cast %22 : vector<1x1x128xf32> to vector<1x128xf32>
    %24 = vector.broadcast %23 : vector<1x128xf32> to vector<16x128xf32>
    %25 = arith.addf %21, %24 : vector<16x128xf32>
    %26 = vector.extract_strided_slice %8 {offsets = [0, 0], sizes = [16, 128], strides = [1, 1]} : vector<16x384xbf16> to vector<16x128xbf16>
    %c0_19 = arith.constant 0 : index
    %c0_20 = arith.constant 0 : index
    %c0_21 = arith.constant 0 : index
    %27 = vector.load %arg8[%c0_19, %c0_20, %c0_21] : memref<3x128x128xbf16, #tpu.memory_space<vmem>>, vector<1x128x128xbf16>
    %28 = vector.shape_cast %27 : vector<1x128x128xbf16> to vector<128x128xbf16>
    %cst_22 = arith.constant dense<0.000000e+00> : vector<16x128xf32>
    %29 = tpu.matmul %26, %28, %cst_22 {dimension_numbers = #tpu.dot_dimension_numbers<[1], [0], [0], [1], [0, 0, 1, 1], [], []>} : vector<16x128xbf16>, vector<128x128xbf16>, vector<16x128xf32> -> vector<16x128xf32>
    %c0_23 = arith.constant 0 : index
    %c0_24 = arith.constant 0 : index
    %c0_25 = arith.constant 0 : index
    %30 = vector.load %arg9[%c0_23, %c0_24, %c0_25] : memref<3x1x128xf32, #tpu.memory_space<vmem>>, vector<1x1x128xf32>
    %31 = vector.shape_cast %30 : vector<1x1x128xf32> to vector<1x128xf32>
    %32 = vector.broadcast %31 : vector<1x128xf32> to vector<16x128xf32>
    %33 = arith.addf %29, %32 : vector<16x128xf32>
    %34 = arith.mulf %33, %25 : vector<16x128xf32>
    %35 = arith.truncf %34 : vector<16x128xf32> to vector<16x128xbf16>
    %c1 = arith.constant 1 : index
    %c0_26 = arith.constant 0 : index
    %c0_27 = arith.constant 0 : index
    %36 = vector.load %arg2[%c1, %c0_26, %c0_27] : memref<3x128x128xbf16, #tpu.memory_space<vmem>>, vector<1x128x128xbf16>
    %37 = vector.shape_cast %36 : vector<1x128x128xbf16> to vector<128x128xbf16>
    %cst_28 = arith.constant dense<0.000000e+00> : vector<16x128xf32>
    %38 = tpu.matmul %35, %37, %cst_28 {dimension_numbers = #tpu.dot_dimension_numbers<[1], [0], [0], [1], [0, 0, 1, 1], [], []>} : vector<16x128xbf16>, vector<128x128xbf16>, vector<16x128xf32> -> vector<16x128xf32>
    %c1_29 = arith.constant 1 : index
    %c0_30 = arith.constant 0 : index
    %c0_31 = arith.constant 0 : index
    %39 = vector.load %arg3[%c1_29, %c0_30, %c0_31] : memref<3x1x128xf32, #tpu.memory_space<vmem>>, vector<1x1x128xf32>
    %40 = vector.shape_cast %39 : vector<1x1x128xf32> to vector<1x128xf32>
    %41 = vector.broadcast %40 : vector<1x128xf32> to vector<16x128xf32>
    %42 = arith.addf %38, %41 : vector<16x128xf32>
    %43 = math.tanh %42 : vector<16x128xf32>
    %44 = arith.truncf %43 : vector<16x128xf32> to vector<16x128xbf16>
    %c1_32 = arith.constant 1 : index
    %c0_33 = arith.constant 0 : index
    %c0_34 = arith.constant 0 : index
    %45 = vector.load %arg4[%c1_32, %c0_33, %c0_34] : memref<3x128x128xbf16, #tpu.memory_space<vmem>>, vector<1x128x128xbf16>
    %46 = vector.shape_cast %45 : vector<1x128x128xbf16> to vector<128x128xbf16>
    %cst_35 = arith.constant dense<0.000000e+00> : vector<16x128xf32>
    %47 = tpu.matmul %44, %46, %cst_35 {dimension_numbers = #tpu.dot_dimension_numbers<[1], [0], [0], [1], [0, 0, 1, 1], [], []>} : vector<16x128xbf16>, vector<128x128xbf16>, vector<16x128xf32> -> vector<16x128xf32>
    %c1_36 = arith.constant 1 : index
    %c0_37 = arith.constant 0 : index
    %c0_38 = arith.constant 0 : index
    %48 = vector.load %arg5[%c1_36, %c0_37, %c0_38] : memref<3x1x128xf32, #tpu.memory_space<vmem>>, vector<1x1x128xf32>
    %49 = vector.shape_cast %48 : vector<1x1x128xf32> to vector<1x128xf32>
    %50 = vector.broadcast %49 : vector<1x128xf32> to vector<16x128xf32>
    %51 = arith.addf %47, %50 : vector<16x128xf32>
    %52 = vector.extract_strided_slice %8 {offsets = [0, 128], sizes = [16, 128], strides = [1, 1]} : vector<16x384xbf16> to vector<16x128xbf16>
    %c1_39 = arith.constant 1 : index
    %c0_40 = arith.constant 0 : index
    %c0_41 = arith.constant 0 : index
    %53 = vector.load %arg8[%c1_39, %c0_40, %c0_41] : memref<3x128x128xbf16, #tpu.memory_space<vmem>>, vector<1x128x128xbf16>
    %54 = vector.shape_cast %53 : vector<1x128x128xbf16> to vector<128x128xbf16>
    %cst_42 = arith.constant dense<0.000000e+00> : vector<16x128xf32>
    %55 = tpu.matmul %52, %54, %cst_42 {dimension_numbers = #tpu.dot_dimension_numbers<[1], [0], [0], [1], [0, 0, 1, 1], [], []>} : vector<16x128xbf16>, vector<128x128xbf16>, vector<16x128xf32> -> vector<16x128xf32>
    %c1_43 = arith.constant 1 : index
    %c0_44 = arith.constant 0 : index
    %c0_45 = arith.constant 0 : index
    %56 = vector.load %arg9[%c1_43, %c0_44, %c0_45] : memref<3x1x128xf32, #tpu.memory_space<vmem>>, vector<1x1x128xf32>
    %57 = vector.shape_cast %56 : vector<1x1x128xf32> to vector<1x128xf32>
    %58 = vector.broadcast %57 : vector<1x128xf32> to vector<16x128xf32>
    %59 = arith.addf %55, %58 : vector<16x128xf32>
    %60 = arith.mulf %59, %51 : vector<16x128xf32>
    %61 = arith.truncf %60 : vector<16x128xf32> to vector<16x128xbf16>
    %c2 = arith.constant 2 : index
    %c0_46 = arith.constant 0 : index
    %c0_47 = arith.constant 0 : index
    %62 = vector.load %arg2[%c2, %c0_46, %c0_47] : memref<3x128x128xbf16, #tpu.memory_space<vmem>>, vector<1x128x128xbf16>
    %63 = vector.shape_cast %62 : vector<1x128x128xbf16> to vector<128x128xbf16>
    %cst_48 = arith.constant dense<0.000000e+00> : vector<16x128xf32>
    %64 = tpu.matmul %61, %63, %cst_48 {dimension_numbers = #tpu.dot_dimension_numbers<[1], [0], [0], [1], [0, 0, 1, 1], [], []>} : vector<16x128xbf16>, vector<128x128xbf16>, vector<16x128xf32> -> vector<16x128xf32>
    %c2_49 = arith.constant 2 : index
    %c0_50 = arith.constant 0 : index
    %c0_51 = arith.constant 0 : index
    %65 = vector.load %arg3[%c2_49, %c0_50, %c0_51] : memref<3x1x128xf32, #tpu.memory_space<vmem>>, vector<1x1x128xf32>
    %66 = vector.shape_cast %65 : vector<1x1x128xf32> to vector<1x128xf32>
    %67 = vector.broadcast %66 : vector<1x128xf32> to vector<16x128xf32>
    %68 = arith.addf %64, %67 : vector<16x128xf32>
    %69 = math.tanh %68 : vector<16x128xf32>
    %70 = arith.truncf %69 : vector<16x128xf32> to vector<16x128xbf16>
    %c2_52 = arith.constant 2 : index
    %c0_53 = arith.constant 0 : index
    %c0_54 = arith.constant 0 : index
    %71 = vector.load %arg4[%c2_52, %c0_53, %c0_54] : memref<3x128x128xbf16, #tpu.memory_space<vmem>>, vector<1x128x128xbf16>
    %72 = vector.shape_cast %71 : vector<1x128x128xbf16> to vector<128x128xbf16>
    %cst_55 = arith.constant dense<0.000000e+00> : vector<16x128xf32>
    %73 = tpu.matmul %70, %72, %cst_55 {dimension_numbers = #tpu.dot_dimension_numbers<[1], [0], [0], [1], [0, 0, 1, 1], [], []>} : vector<16x128xbf16>, vector<128x128xbf16>, vector<16x128xf32> -> vector<16x128xf32>
    %c2_56 = arith.constant 2 : index
    %c0_57 = arith.constant 0 : index
    %c0_58 = arith.constant 0 : index
    %74 = vector.load %arg5[%c2_56, %c0_57, %c0_58] : memref<3x1x128xf32, #tpu.memory_space<vmem>>, vector<1x1x128xf32>
    %75 = vector.shape_cast %74 : vector<1x1x128xf32> to vector<1x128xf32>
    %76 = vector.broadcast %75 : vector<1x128xf32> to vector<16x128xf32>
    %77 = arith.addf %73, %76 : vector<16x128xf32>
    %78 = vector.extract_strided_slice %8 {offsets = [0, 256], sizes = [16, 128], strides = [1, 1]} : vector<16x384xbf16> to vector<16x128xbf16>
    %c2_59 = arith.constant 2 : index
    %c0_60 = arith.constant 0 : index
    %c0_61 = arith.constant 0 : index
    %79 = vector.load %arg8[%c2_59, %c0_60, %c0_61] : memref<3x128x128xbf16, #tpu.memory_space<vmem>>, vector<1x128x128xbf16>
    %80 = vector.shape_cast %79 : vector<1x128x128xbf16> to vector<128x128xbf16>
    %cst_62 = arith.constant dense<0.000000e+00> : vector<16x128xf32>
    %81 = tpu.matmul %78, %80, %cst_62 {dimension_numbers = #tpu.dot_dimension_numbers<[1], [0], [0], [1], [0, 0, 1, 1], [], []>} : vector<16x128xbf16>, vector<128x128xbf16>, vector<16x128xf32> -> vector<16x128xf32>
    %c2_63 = arith.constant 2 : index
    %c0_64 = arith.constant 0 : index
    %c0_65 = arith.constant 0 : index
    %82 = vector.load %arg9[%c2_63, %c0_64, %c0_65] : memref<3x1x128xf32, #tpu.memory_space<vmem>>, vector<1x1x128xf32>
    %83 = vector.shape_cast %82 : vector<1x1x128xf32> to vector<1x128xf32>
    %84 = vector.broadcast %83 : vector<1x128xf32> to vector<16x128xf32>
    %85 = arith.addf %81, %84 : vector<16x128xf32>
    %86 = arith.mulf %85, %77 : vector<16x128xf32>
    %cst_66 = arith.constant dense<0.000000e+00> : vector<16xf32>
    %87 = vector.multi_reduction <add>, %86, %cst_66 [1] : vector<16x128xf32> to vector<16xf32>
    %88 = vector.shape_cast %87 : vector<16xf32> to vector<1x16xf32>
    %c0_67 = arith.constant 0 : index
    %c0_68 = arith.constant 0 : index
    %89 = vector.load %arg10[%c0_67, %c0_68] : memref<1x16xf32, #tpu.memory_space<vmem>>, vector<1x16xf32>
    tpu.vector_store %arg10[%c0_67, %c0_68], %88 {strides = array<i32>} : memref<1x16xf32, #tpu.memory_space<vmem>>, vector<1x16xf32>,
    return
  }
  func.func @transform_0(%arg0: i32) -> (i32, i32) {
    %c0_i32 = arith.constant 0 : i32
    %c0_i32_0 = arith.constant 0 : i32
    return %arg0, %c0_i32 : i32, i32
  }
  func.func @transform_1(%arg0: i32) -> (i32, i32, i32) {
    %c0_i32 = arith.constant 0 : i32
    %c0_i32_0 = arith.constant 0 : i32
    %c0_i32_1 = arith.constant 0 : i32
    %c0_i32_2 = arith.constant 0 : i32
    return %c0_i32, %c0_i32_0, %c0_i32_1 : i32, i32, i32
  }
  func.func @transform_2(%arg0: i32) -> (i32, i32, i32) {
    %c0_i32 = arith.constant 0 : i32
    %c0_i32_0 = arith.constant 0 : i32
    %c0_i32_1 = arith.constant 0 : i32
    %c0_i32_2 = arith.constant 0 : i32
    return %c0_i32, %c0_i32_0, %c0_i32_1 : i32, i32, i32
  }
  func.func @transform_3(%arg0: i32) -> (i32, i32, i32) {
    %c0_i32 = arith.constant 0 : i32
    %c0_i32_0 = arith.constant 0 : i32
    %c0_i32_1 = arith.constant 0 : i32
    %c0_i32_2 = arith.constant 0 : i32
    return %c0_i32, %c0_i32_0, %c0_i32_1 : i32, i32, i32
  }
  func.func @transform_4(%arg0: i32) -> (i32, i32, i32) {
    %c0_i32 = arith.constant 0 : i32
    %c0_i32_0 = arith.constant 0 : i32
    %c0_i32_1 = arith.constant 0 : i32
    %c0_i32_2 = arith.constant 0 : i32
    return %c0_i32, %c0_i32_0, %c0_i32_1 : i32, i32, i32
  }
  func.func @transform_5(%arg0: i32) -> (i32, i32) {
    %c0_i32 = arith.constant 0 : i32
    %c0_i32_0 = arith.constant 0 : i32
    %c0_i32_1 = arith.constant 0 : i32
    return %c0_i32, %c0_i32_0 : i32, i32
  }
  func.func @transform_6(%arg0: i32) -> (i32, i32) {
    %c0_i32 = arith.constant 0 : i32
    %c0_i32_0 = arith.constant 0 : i32
    %c0_i32_1 = arith.constant 0 : i32
    return %c0_i32, %c0_i32_0 : i32, i32
  }
  func.func @transform_7(%arg0: i32) -> (i32, i32, i32) {
    %c0_i32 = arith.constant 0 : i32
    %c0_i32_0 = arith.constant 0 : i32
    %c0_i32_1 = arith.constant 0 : i32
    %c0_i32_2 = arith.constant 0 : i32
    return %c0_i32, %c0_i32_0, %c0_i32_1 : i32, i32, i32
  }
  func.func @transform_8(%arg0: i32) -> (i32, i32, i32) {
    %c0_i32 = arith.constant 0 : i32
    %c0_i32_0 = arith.constant 0 : i32
    %c0_i32_1 = arith.constant 0 : i32
    %c0_i32_2 = arith.constant 0 : i32
    return %c0_i32, %c0_i32_0, %c0_i32_1 : i32, i32, i32
  }
  func.func @transform_9(%arg0: i32) -> (i32, i32) {
    %c0_i32 = arith.constant 0 : i32
    %c0_i32_0 = arith.constant 0 : i32
    return %c0_i32, %arg0 : i32, i32
  }
}

</mosaic_0001>

<llo_original>
// kernel: tpu_custom_call.1
$region0: #{tpu_custom_call.1}
  #allocation0 [shape = 'u32[]', space=smem, size = 0x4, offset = 0x4, fixed_abs, tag = 'smem constant byte address 0x4 - core index']
  #allocation1 [shape = 'u32[144,128]{1,0:T(1,128)}', space=vmem, size = 0x12000, scoped, tag = 'internal scratch']
  %s0 = inlined_call_operand.hbm [shape: f32[16,128], index: 0, kind: input, shape index: {}]
  %s1 = inlined_call_operand.hbm [shape: bf16[3,128,128], index: 1, kind: input, shape index: {}]
  %s2 = inlined_call_operand.vmem [shape: f32[3,1,128], index: 2, kind: input, shape index: {}]
  %s3 = inlined_call_operand.hbm [shape: bf16[3,128,128], index: 3, kind: input, shape index: {}]
  %s4 = inlined_call_operand.vmem [shape: f32[3,1,128], index: 4, kind: input, shape index: {}]
  %s5 = inlined_call_operand.hbm [shape: bf16[128,384], index: 5, kind: input, shape index: {}]
  %s6 = inlined_call_operand.vmem [shape: f32[1,384], index: 6, kind: input, shape index: {}]
  %s7 = inlined_call_operand.hbm [shape: bf16[3,128,128], index: 7, kind: input, shape index: {}]
  %s8 = inlined_call_operand.vmem [shape: f32[3,1,128], index: 8, kind: input, shape index: {}]
  %s9 = inlined_call_operand.hbm [shape: f32[1,16], index: 9, kind: output, shape index: {}]
  %s10 = sld [smem:[#allocation0]]
  $region66: #{tpu_custom_call.1} parent=0
    _
  %s12 = ssub.s32 1, %s10
  %s13 = scalar_select 0, %s12, %s10
  $region1: #{tpu_custom_call.1} parent=0
    #allocation2 [shape = 'u8[8192]{0}', space=vmem, size = 0x2000, scoped, tag = 'input window, operand 0, single buffered']
    #allocation3 [shape = 's32[1]{0}', space=sflag, size = 0x4, scoped, tag = 'scoped memory for tpu_custom_call.1']
    #allocation4 [shape = 's32[1]{0}', space=sflag, size = 0x4, scoped, tag = 'scoped memory for tpu_custom_call.1']
    #allocation5 [shape = 'u8[98304]{0}', space=vmem, size = 0x18000, scoped, tag = 'input window, operand 1, single buffered']
    #allocation6 [shape = 's32[1]{0}', space=sflag, size = 0x4, scoped, tag = 'scoped memory for tpu_custom_call.1']
    #allocation7 [shape = 'u8[98304]{0}', space=vmem, size = 0x18000, scoped, tag = 'input window, operand 3, single buffered']
    #allocation8 [shape = 'u8[98304]{0}', space=vmem, size = 0x18000, scoped, tag = 'input window, operand 5, single buffered']
    #allocation9 [shape = 's32[1]{0}', space=sflag, size = 0x4, scoped, tag = 'scoped memory for tpu_custom_call.1']
    #allocation10 [shape = 'u8[98304]{0}', space=vmem, size = 0x18000, scoped, tag = 'input window, operand 7, single buffered']
    #allocation11 [shape = 'u8[512]{0}', space=vmem, size = 0x400, scoped, tag = 'output window, operand 0, single buffered']
    %14 = vsyncpa [#allocation3], 0
    %15 = vsyncpa [#allocation6], 0
    %16 = vsyncpa [#allocation9], 0
    %17 = vsyncpa [#allocation4], 0
    // Predicated region
    $region2: #{tpu_custom_call.1} parent=1 // pred_check
      _
    $region3: #{tpu_custom_call.1} parent=1 // pred_check_branch
      %19 = sbr.rel (0) target = $region5
    $region4: #{tpu_custom_call.1} parent=1 // pred_region
      %s21 = ssub.s32 256, 256
      %22 = vsyncadd [#allocation3], %s21
      %s23 = sshll.u32 [#allocation2], 4
      %s24 = int_to_ptr.vmem [resolvable:$true] %s23
      %29 = dma.hbm_to_vmem [thread:$0]  %s0, 256, %s24, [#allocation3], 128, 128, 8
    $region5: #{tpu_custom_call.1} parent=1 // pred_fallthru
      _
    // Predicated region
    $region6: #{tpu_custom_call.1} parent=1 // pred_check
      _
    $region7: #{tpu_custom_call.1} parent=1 // pred_check_branch
      %31 = sbr.rel (0) target = $region9
    $region8: #{tpu_custom_call.1} parent=1 // pred_region
      %s33 = ssub.s32 3072, 3072
      %34 = vsyncadd [#allocation6], %s33
      %s35 = sshll.u32 [#allocation5], 4
      %s36 = int_to_ptr.vmem [resolvable:$true] %s35
      %41 = dma.hbm_to_vmem [thread:$0]  %s1, 3072, %s36, [#allocation6], 64, 64, 4
    $region9: #{tpu_custom_call.1} parent=1 // pred_fallthru
      _
    // Predicated region
    $region10: #{tpu_custom_call.1} parent=1 // pred_check
      _
    $region11: #{tpu_custom_call.1} parent=1 // pred_check_branch
      %43 = sbr.rel (0) target = $region13
    $region12: #{tpu_custom_call.1} parent=1 // pred_region
      _
    $region13: #{tpu_custom_call.1} parent=1 // pred_fallthru
      _
    // Predicated region
    $region14: #{tpu_custom_call.1} parent=1 // pred_check
      _
    $region15: #{tpu_custom_call.1} parent=1 // pred_check_branch
      %45 = sbr.rel (0) target = $region17
    $region16: #{tpu_custom_call.1} parent=1 // pred_region
      %s47 = ssub.s32 3072, 3072
      %48 = vsyncadd [#allocation6], %s47
      %s49 = sshll.u32 [#allocation7], 4
      %s50 = int_to_ptr.vmem [resolvable:$true] %s49
      %55 = dma.hbm_to_vmem [thread:$0]  %s3, 3072, %s50, [#allocation6], 64, 64, 4
    $region17: #{tpu_custom_call.1} parent=1 // pred_fallthru
      _
    // Predicated region
    $region18: #{tpu_custom_call.1} parent=1 // pred_check
      _
    $region19: #{tpu_custom_call.1} parent=1 // pred_check_branch
      %57 = sbr.rel (0) target = $region21
    $region20: #{tpu_custom_call.1} parent=1 // pred_region
      _
    $region21: #{tpu_custom_call.1} parent=1 // pred_fallthru
      _
    // Predicated region
    $region22: #{tpu_custom_call.1} parent=1 // pred_check
      _
    $region23: #{tpu_custom_call.1} parent=1 // pred_check_branch
      %59 = sbr.rel (0) target = $region25
    $region24: #{tpu_custom_call.1} parent=1 // pred_region
      %s61 = ssub.s32 3072, 3072
      %62 = vsyncadd [#allocation9], %s61
      %s63 = sshll.u32 [#allocation8], 4
      %s64 = int_to_ptr.vmem [resolvable:$true] %s63
      %69 = dma.hbm_to_vmem [thread:$0]  %s5, 3072, %s64, [#allocation9], 192, 192, 12
    $region25: #{tpu_custom_call.1} parent=1 // pred_fallthru
      _
    // Predicated region
    $region26: #{tpu_custom_call.1} parent=1 // pred_check
      _
    $region27: #{tpu_custom_call.1} parent=1 // pred_check_branch
      %71 = sbr.rel (0) target = $region29
    $region28: #{tpu_custom_call.1} parent=1 // pred_region
      _
    $region29: #{tpu_custom_call.1} parent=1 // pred_fallthru
      _
    // Predicated region
    $region30: #{tpu_custom_call.1} parent=1 // pred_check
      _
    $region31: #{tpu_custom_call.1} parent=1 // pred_check_branch
      %73 = sbr.rel (0) target = $region33
    $region32: #{tpu_custom_call.1} parent=1 // pred_region
      %s75 = ssub.s32 3072, 3072
      %76 = vsyncadd [#allocation9], %s75
      %s77 = sshll.u32 [#allocation10], 4
      %s78 = int_to_ptr.vmem [resolvable:$true] %s77
      %83 = dma.hbm_to_vmem [thread:$0]  %s7, 3072, %s78, [#allocation9], 64, 64, 4
    $region33: #{tpu_custom_call.1} parent=1 // pred_fallthru
      _
    // Predicated region
    $region34: #{tpu_custom_call.1} parent=1 // pred_check
      _
    $region35: #{tpu_custom_call.1} parent=1 // pred_check_branch
      %85 = sbr.rel (0) target = $region37
    $region36: #{tpu_custom_call.1} parent=1 // pred_region
      _
    $region37: #{tpu_custom_call.1} parent=1 // pred_fallthru
      _
    // Predicated region
    $region38: #{tpu_custom_call.1} parent=1 // pred_check
      _
    $region39: #{tpu_custom_call.1} parent=1 // pred_check_branch
      %87 = sbr.rel (0) target = $region41
    $region40: #{tpu_custom_call.1} parent=1 // pred_region
      %88 = dma.done [#allocation3], 256
    $region41: #{tpu_custom_call.1} parent=1 // pred_fallthru
      _
    // Predicated region
    $region42: #{tpu_custom_call.1} parent=1 // pred_check
      _
    $region43: #{tpu_custom_call.1} parent=1 // pred_check_branch
      %90 = sbr.rel (0) target = $region45
    $region44: #{tpu_custom_call.1} parent=1 // pred_region
      %91 = dma.done [#allocation6], 3072
    $region45: #{tpu_custom_call.1} parent=1 // pred_fallthru
      _
    // Predicated region
    $region46: #{tpu_custom_call.1} parent=1 // pred_check
      _
    $region47: #{tpu_custom_call.1} parent=1 // pred_check_branch
      %93 = sbr.rel (0) target = $region49
    $region48: #{tpu_custom_call.1} parent=1 // pred_region
      %94 = dma.done [#allocation6], 3072
    $region49: #{tpu_custom_call.1} parent=1 // pred_fallthru
      _
    // Predicated region
    $region50: #{tpu_custom_call.1} parent=1 // pred_check
      _
    $region51: #{tpu_custom_call.1} parent=1 // pred_check_branch
      %96 = sbr.rel (0) target = $region53
    $region52: #{tpu_custom_call.1} parent=1 // pred_region
      %97 = dma.done [#allocation9], 3072
    $region53: #{tpu_custom_call.1} parent=1 // pred_fallthru
      _
    // Predicated region
    $region54: #{tpu_custom_call.1} parent=1 // pred_check
      _
    $region55: #{tpu_custom_call.1} parent=1 // pred_check_branch
      %99 = sbr.rel (0) target = $region57
    $region56: #{tpu_custom_call.1} parent=1 // pred_region
      %100 = dma.done [#allocation9], 3072
    $region57: #{tpu_custom_call.1} parent=1 // pred_fallthru
      _
    %v102 = vld [vmem:[#allocation2] sm:$0xff]
    %v103 = vld [vmem:[#allocation2 + $0x8] sm:$0xff]
    %v104 = vpack.c.bf16 %v103, %v102
    %v105 = vld [vmem:[#allocation8] sm:$0xff]
    %v106 = vld [vmem:[#allocation8 + $0x8] sm:$0xf]
    %v107 = vld [vmem:[#allocation8 + $0xc] sm:$0xff]
    %v108 = vld [vmem:[#allocation8 + $0x14] sm:$0xf]
    %v109 = vld [vmem:[#allocation8 + $0x18] sm:$0xff]
    %v110 = vld [vmem:[#allocation8 + $0x20] sm:$0xf]
    %v111 = vld [vmem:[#allocation8 + $0x24] sm:$0xff]
    %v112 = vld [vmem:[#allocation8 + $0x2c] sm:$0xf]
    %v113 = vld [vmem:[#allocation8 + $0x30] sm:$0xff]
    %v114 = vld [vmem:[#allocation8 + $0x38] sm:$0xf]
    %v115 = vld [vmem:[#allocation8 + $0x3c] sm:$0xff]
    %v116 = vld [vmem:[#allocation8 + $0x44] sm:$0xf]
    %v117 = vld [vmem:[#allocation8 + $0x48] sm:$0xff]
    %v118 = vld [vmem:[#allocation8 + $0x50] sm:$0xf]
    %v119 = vld [vmem:[#allocation8 + $0x54] sm:$0xff]
    %v120 = vld [vmem:[#allocation8 + $0x5c] sm:$0xf]
    %v121 = vld [vmem:[#allocation8 + $0x60] sm:$0xff]
    %v122 = vld [vmem:[#allocation8 + $0x68] sm:$0xf]
    %v123 = vld [vmem:[#allocation8 + $0x6c] sm:$0xff]
    %v124 = vld [vmem:[#allocation8 + $0x74] sm:$0xf]
    %v125 = vld [vmem:[#allocation8 + $0x78] sm:$0xff]
    %v126 = vld [vmem:[#allocation8 + $0x80] sm:$0xf]
    %v127 = vld [vmem:[#allocation8 + $0x84] sm:$0xff]
    %v128 = vld [vmem:[#allocation8 + $0x8c] sm:$0xf]
    %v129 = vld [vmem:[#allocation8 + $0x90] sm:$0xff]
    %v130 = vld [vmem:[#allocation8 + $0x98] sm:$0xf]
    %v131 = vld [vmem:[#allocation8 + $0x9c] sm:$0xff]
    %v132 = vld [vmem:[#allocation8 + $0xa4] sm:$0xf]
    %v133 = vld [vmem:[#allocation8 + $0xa8] sm:$0xff]
    %v134 = vld [vmem:[#allocation8 + $0xb0] sm:$0xf]
    %v135 = vld [vmem:[#allocation8 + $0xb4] sm:$0xff]
    %v136 = vld [vmem:[#allocation8 + $0xbc] sm:$0xf]
    %v137 = vld [vmem:[%s6] sm:$0x7]
    %v139 = vlaneseq
    %v140 = vshrl.u32 %v139, 7
    %v141 = vsub.s32 0, %v140
    %v142 = vrot.slane %v137, %v141
    %v143 = vlaneseq
    %v144 = vshrl.u32 %v143, 7
    %v145 = vsub.s32 1, %v144
    %v146 = vrot.slane %v137, %v145
    %v147 = vlaneseq
    %v148 = vshrl.u32 %v147, 7
    %v149 = vsub.s32 2, %v148
    %v150 = vrot.slane %v137, %v149
    %v186 = vunpack.c.l.b16 %v105
    %v187 = vunpack.c.h.b16 %v105
    %v188 = vunpack.c.l.b16 %v106
    %v189 = vunpack.c.l.b16 %v107
    %v190 = vunpack.c.h.b16 %v107
    %v191 = vunpack.c.l.b16 %v108
    %v192 = vunpack.c.l.b16 %v109
    %v193 = vunpack.c.h.b16 %v109
    %v194 = vunpack.c.l.b16 %v110
    %v195 = vunpack.c.l.b16 %v111
    %v196 = vunpack.c.h.b16 %v111
    %v197 = vunpack.c.l.b16 %v112
    %v198 = vunpack.c.l.b16 %v113
    %v199 = vunpack.c.h.b16 %v113
    %v200 = vunpack.c.l.b16 %v114
    %v201 = vunpack.c.l.b16 %v115
    %v202 = vunpack.c.h.b16 %v115
    %v203 = vunpack.c.l.b16 %v116
    %v204 = vunpack.c.l.b16 %v117
    %v205 = vunpack.c.h.b16 %v117
    %v206 = vunpack.c.l.b16 %v118
    %v207 = vunpack.c.l.b16 %v119
    %v208 = vunpack.c.h.b16 %v119
    %v209 = vunpack.c.l.b16 %v120
    %v210 = vunpack.c.l.b16 %v121
    %v211 = vunpack.c.h.b16 %v121
    %v212 = vunpack.c.l.b16 %v122
    %v213 = vunpack.c.l.b16 %v123
    %v214 = vunpack.c.h.b16 %v123
    %v215 = vunpack.c.l.b16 %v124
    %v216 = vunpack.c.l.b16 %v125
    %v217 = vunpack.c.h.b16 %v125
    %v218 = vunpack.c.l.b16 %v126
    %v219 = vunpack.c.l.b16 %v127
    %v220 = vunpack.c.h.b16 %v127
    %v221 = vunpack.c.l.b16 %v128
    %v222 = vunpack.c.l.b16 %v129
    %v223 = vunpack.c.h.b16 %v129
    %v224 = vunpack.c.l.b16 %v130
    %v225 = vunpack.c.l.b16 %v131
    %v226 = vunpack.c.h.b16 %v131
    %v227 = vunpack.c.l.b16 %v132
    %v228 = vunpack.c.l.b16 %v133
    %v229 = vunpack.c.h.b16 %v133
    %v230 = vunpack.c.l.b16 %v134
    %v231 = vunpack.c.l.b16 %v135
    %v232 = vunpack.c.h.b16 %v135
    %v233 = vunpack.c.l.b16 %v136
    %v234 = vpack.c.b16 %v189, %v186
    %v235 = vpack.c.b16 %v190, %v187
    %v236 = vpack.c.b16 %v191, %v188
    %v237 = vpack.c.b16 %v195, %v192
    %v238 = vpack.c.b16 %v196, %v193
    %v239 = vpack.c.b16 %v197, %v194
    %v240 = vpack.c.b16 %v201, %v198
    %v241 = vpack.c.b16 %v202, %v199
    %v242 = vpack.c.b16 %v203, %v200
    %v243 = vpack.c.b16 %v207, %v204
    %v244 = vpack.c.b16 %v208, %v205
    %v245 = vpack.c.b16 %v209, %v206
    %v246 = vpack.c.b16 %v213, %v210
    %v247 = vpack.c.b16 %v214, %v211
    %v248 = vpack.c.b16 %v215, %v212
    %v249 = vpack.c.b16 %v219, %v216
    %v250 = vpack.c.b16 %v220, %v217
    %v251 = vpack.c.b16 %v221, %v218
    %v252 = vpack.c.b16 %v225, %v222
    %v253 = vpack.c.b16 %v226, %v223
    %v254 = vpack.c.b16 %v227, %v224
    %v255 = vpack.c.b16 %v231, %v228
    %v256 = vpack.c.b16 %v232, %v229
    %v257 = vpack.c.b16 %v233, %v230
    %282 = vmatprep.subr.bf16.mxu0 %v235
    %283 = vmatpush1.bf16.msra.mxu0 %v234
    %284 = vmatprep.subr.bf16.mxu0 %v238
    %285 = vmatpush1.bf16.msra.mxu0 %v237
    %286 = vmatprep.subr.bf16.mxu0 %v241
    %287 = vmatpush1.bf16.msra.mxu0 %v240
    %288 = vmatprep.subr.bf16.mxu0 %v244
    %289 = vmatpush1.bf16.msra.mxu0 %v243
    %290 = vmatprep.subr.bf16.mxu0 %v247
    %291 = vmatpush1.bf16.msra.mxu0 %v246
    %292 = vmatprep.subr.bf16.mxu0 %v250
    %293 = vmatpush1.bf16.msra.mxu0 %v249
    %294 = vmatprep.subr.bf16.mxu0 %v253
    %295 = vmatpush1.bf16.msra.mxu0 %v252
    %296 = vmatprep.subr.bf16.mxu0 %v256
    %297 = vmatpush1.bf16.msra.mxu0 %v255
    %298 = vmatprep.subr.bf16.mxu0 0
    %299 = vmatpush1.bf16.msra.mxu0 0
    %300 = vmatprep.subr.bf16.mxu0 0
    %301 = vmatpush1.bf16.msra.mxu0 0
    %302 = vmatprep.subr.bf16.mxu0 0
    %303 = vmatpush1.bf16.msra.mxu0 0
    %304 = vmatprep.subr.bf16.mxu0 0
    %305 = vmatpush1.bf16.msra.mxu0 0
    %306 = vmatprep.subr.bf16.mxu0 0
    %307 = vmatpush1.bf16.msra.mxu0 0
    %308 = vmatprep.subr.bf16.mxu0 0
    %309 = vmatpush1.bf16.msra.mxu0 0
    %310 = vmatprep.subr.bf16.mxu0 0
    %311 = vmatpush1.bf16.msra.mxu0 0
    %312 = vmatprep.subr.bf16.mxu0 0
    %313 = vmatpush1.bf16.msra.mxu0 0
    %314 = vmatprep.mubr.bf16.mxu0 0
    %315 = vmatmul.mubr.bf16.gmra.mrb[0].mxu0 %v104
    %v316 = vpop.f32.mrb[0].mxu0
    %v317 = vadd.f32 %v142, %v316
    %v318 = vpop.f32.mrb[0].mxu0
    %v319 = vadd.f32 %v146, %v318
    %v320 = vpop.f32.mrb[0].mxu0
    %v321 = vadd.f32 %v142, %v320
    %v322 = vpop.f32.mrb[0].mxu0
    %v323 = vadd.f32 %v146, %v322
    %324 = vdwg.mxu0
    %325 = vmatprep.subr.bf16.mxu0 0
    %326 = vmatpush1.bf16.msra.mxu0 %v236
    %327 = vmatprep.subr.bf16.mxu0 0
    %328 = vmatpush1.bf16.msra.mxu0 %v239
    %329 = vmatprep.subr.bf16.mxu0 0
    %330 = vmatpush1.bf16.msra.mxu0 %v242
    %331 = vmatprep.subr.bf16.mxu0 0
    %332 = vmatpush1.bf16.msra.mxu0 %v245
    %333 = vmatprep.subr.bf16.mxu0 0
    %334 = vmatpush1.bf16.msra.mxu0 %v248
    %335 = vmatprep.subr.bf16.mxu0 0
    %336 = vmatpush1.bf16.msra.mxu0 %v251
    %337 = vmatprep.subr.bf16.mxu0 0
    %338 = vmatpush1.bf16.msra.mxu0 %v254
    %339 = vmatprep.subr.bf16.mxu0 0
    %340 = vmatpush1.bf16.msra.mxu0 %v257
    %341 = vmatprep.subr.bf16.mxu0 0
    %342 = vmatpush1.bf16.msra.mxu0 0
    %343 = vmatprep.subr.bf16.mxu0 0
    %344 = vmatpush1.bf16.msra.mxu0 0
    %345 = vmatprep.subr.bf16.mxu0 0
    %346 = vmatpush1.bf16.msra.mxu0 0
    %347 = vmatprep.subr.bf16.mxu0 0
    %348 = vmatpush1.bf16.msra.mxu0 0
    %349 = vmatprep.subr.bf16.mxu0 0
    %350 = vmatpush1.bf16.msra.mxu0 0
    %351 = vmatprep.subr.bf16.mxu0 0
    %352 = vmatpush1.bf16.msra.mxu0 0
    %353 = vmatprep.subr.bf16.mxu0 0
    %354 = vmatpush1.bf16.msra.mxu0 0
    %355 = vmatprep.subr.bf16.mxu0 0
    %356 = vmatpush1.bf16.msra.mxu0 0
    %357 = vmatprep.mubr.bf16.mxu0 0
    %358 = vmatmul.mubr.bf16.gmra.mrb[0].mxu0 %v104
    %v359 = vpop.f32.mrb[0].mxu0
    %v360 = vadd.f32 %v150, %v359
    %v361 = vpop.f32.mrb[0].mxu0
    %v362 = vpop.f32.mrb[0].mxu0
    %v363 = vadd.f32 %v150, %v362
    %v364 = vpop.f32.mrb[0].mxu0
    %365 = vdwg.mxu0
    %v366 = vtanh.pop %v317
    %v367 = vtanh.pop %v319
    %v368 = vtanh.pop %v360
    %v369 = vtanh.pop %v321
    %v370 = vtanh.pop %v323
    %v371 = vtanh.pop %v363
    %v372 = vpack.c.bf16 %v369, %v366
    %v373 = vpack.c.bf16 %v370, %v367
    %v374 = vpack.c.bf16 %v371, %v368
    %v375 = vld [vmem:[#allocation5] sm:$0xf]
    %v376 = vld [vmem:[#allocation5 + $0x4] sm:$0xf]
    %v377 = vld [vmem:[#allocation5 + $0x8] sm:$0xf]
    %v378 = vld [vmem:[#allocation5 + $0xc] sm:$0xf]
    %v379 = vld [vmem:[#allocation5 + $0x10] sm:$0xf]
    %v380 = vld [vmem:[#allocation5 + $0x14] sm:$0xf]
    %v381 = vld [vmem:[#allocation5 + $0x18] sm:$0xf]
    %v382 = vld [vmem:[#allocation5 + $0x1c] sm:$0xf]
    %v383 = vld [vmem:[#allocation5 + $0x20] sm:$0xf]
    %v384 = vld [vmem:[#allocation5 + $0x24] sm:$0xf]
    %v385 = vld [vmem:[#allocation5 + $0x28] sm:$0xf]
    %v386 = vld [vmem:[#allocation5 + $0x2c] sm:$0xf]
    %v387 = vld [vmem:[#allocation5 + $0x30] sm:$0xf]
    %v388 = vld [vmem:[#allocation5 + $0x34] sm:$0xf]
    %v389 = vld [vmem:[#allocation5 + $0x38] sm:$0xf]
    %v390 = vld [vmem:[#allocation5 + $0x3c] sm:$0xf]
    %v391 = vld [vmem:[%s2] sm:$0x1]
    %v393 = vlaneseq
    %v394 = vshrl.u32 %v393, 7
    %v395 = vsub.s32 0, %v394
    %v396 = vrot.slane %v391, %v395
    %v414 = vunpack.c.l.b16 %v375
    %v415 = vunpack.c.l.b16 %v376
    %v416 = vunpack.c.l.b16 %v377
    %v417 = vunpack.c.l.b16 %v378
    %v418 = vunpack.c.l.b16 %v379
    %v419 = vunpack.c.l.b16 %v380
    %v420 = vunpack.c.l.b16 %v381
    %v421 = vunpack.c.l.b16 %v382
    %v422 = vunpack.c.l.b16 %v383
    %v423 = vunpack.c.l.b16 %v384
    %v424 = vunpack.c.l.b16 %v385
    %v425 = vunpack.c.l.b16 %v386
    %v426 = vunpack.c.l.b16 %v387
    %v427 = vunpack.c.l.b16 %v388
    %v428 = vunpack.c.l.b16 %v389
    %v429 = vunpack.c.l.b16 %v390
    %v430 = vpack.c.b16 %v415, %v414
    %v431 = vpack.c.b16 %v417, %v416
    %v432 = vpack.c.b16 %v419, %v418
    %v433 = vpack.c.b16 %v421, %v420
    %v434 = vpack.c.b16 %v423, %v422
    %v435 = vpack.c.b16 %v425, %v424
    %v436 = vpack.c.b16 %v427, %v426
    %v437 = vpack.c.b16 %v429, %v428
    %446 = vmatprep.subr.bf16.mxu0 0
    %447 = vmatpush1.bf16.msra.mxu0 %v430
    %448 = vmatprep.subr.bf16.mxu0 0
    %449 = vmatpush1.bf16.msra.mxu0 %v431
    %450 = vmatprep.subr.bf16.mxu0 0
    %451 = vmatpush1.bf16.msra.mxu0 %v432
    %452 = vmatprep.subr.bf16.mxu0 0
    %453 = vmatpush1.bf16.msra.mxu0 %v433
    %454 = vmatprep.subr.bf16.mxu0 0
    %455 = vmatpush1.bf16.msra.mxu0 %v434
    %456 = vmatprep.subr.bf16.mxu0 0
    %457 = vmatpush1.bf16.msra.mxu0 %v435
    %458 = vmatprep.subr.bf16.mxu0 0
    %459 = vmatpush1.bf16.msra.mxu0 %v436
    %460 = vmatprep.subr.bf16.mxu0 0
    %461 = vmatpush1.bf16.msra.mxu0 %v437
    %462 = vmatprep.subr.bf16.mxu0 0
    %463 = vmatpush1.bf16.msra.mxu0 0
    %464 = vmatprep.subr.bf16.mxu0 0
    %465 = vmatpush1.bf16.msra.mxu0 0
    %466 = vmatprep.subr.bf16.mxu0 0
    %467 = vmatpush1.bf16.msra.mxu0 0
    %468 = vmatprep.subr.bf16.mxu0 0
    %469 = vmatpush1.bf16.msra.mxu0 0
    %470 = vmatprep.subr.bf16.mxu0 0
    %471 = vmatpush1.bf16.msra.mxu0 0
    %472 = vmatprep.subr.bf16.mxu0 0
    %473 = vmatpush1.bf16.msra.mxu0 0
    %474 = vmatprep.subr.bf16.mxu0 0
    %475 = vmatpush1.bf16.msra.mxu0 0
    %476 = vmatprep.subr.bf16.mxu0 0
    %477 = vmatpush1.bf16.msra.mxu0 0
    %478 = vmatprep.mubr.bf16.mxu0 0
    %479 = vmatmul.mubr.bf16.gmra.mrb[0].mxu0 %v104
    %v480 = vpop.f32.mrb[0].mxu0
    %v481 = vadd.f32 %v396, %v480
    %v482 = vpop.f32.mrb[0].mxu0
    %v483 = vpop.f32.mrb[0].mxu0
    %v484 = vadd.f32 %v396, %v483
    %v485 = vpop.f32.mrb[0].mxu0
    %486 = vdwg.mxu0
    %v487 = vtanh.pop %v481
    %v488 = vtanh.pop %v484
    %v489 = vpack.c.bf16 %v488, %v487
    %v490 = vld [vmem:[#allocation7] sm:$0xf]
    %v491 = vld [vmem:[#allocation7 + $0x4] sm:$0xf]
    %v492 = vld [vmem:[#allocation7 + $0x8] sm:$0xf]
    %v493 = vld [vmem:[#allocation7 + $0xc] sm:$0xf]
    %v494 = vld [vmem:[#allocation7 + $0x10] sm:$0xf]
    %v495 = vld [vmem:[#allocation7 + $0x14] sm:$0xf]
    %v496 = vld [vmem:[#allocation7 + $0x18] sm:$0xf]
    %v497 = vld [vmem:[#allocation7 + $0x1c] sm:$0xf]
    %v498 = vld [vmem:[#allocation7 + $0x20] sm:$0xf]
    %v499 = vld [vmem:[#allocation7 + $0x24] sm:$0xf]
    %v500 = vld [vmem:[#allocation7 + $0x28] sm:$0xf]
    %v501 = vld [vmem:[#allocation7 + $0x2c] sm:$0xf]
    %v502 = vld [vmem:[#allocation7 + $0x30] sm:$0xf]
    %v503 = vld [vmem:[#allocation7 + $0x34] sm:$0xf]
    %v504 = vld [vmem:[#allocation7 + $0x38] sm:$0xf]
    %v505 = vld [vmem:[#allocation7 + $0x3c] sm:$0xf]
    %v506 = vld [vmem:[%s4] sm:$0x1]
    %v508 = vlaneseq
    %v509 = vshrl.u32 %v508, 7
    %v510 = vsub.s32 0, %v509
    %v511 = vrot.slane %v506, %v510
    %v529 = vunpack.c.l.b16 %v490
    %v530 = vunpack.c.l.b16 %v491
    %v531 = vunpack.c.l.b16 %v492
    %v532 = vunpack.c.l.b16 %v493
    %v533 = vunpack.c.l.b16 %v494
    %v534 = vunpack.c.l.b16 %v495
    %v535 = vunpack.c.l.b16 %v496
    %v536 = vunpack.c.l.b16 %v497
    %v537 = vunpack.c.l.b16 %v498
    %v538 = vunpack.c.l.b16 %v499
    %v539 = vunpack.c.l.b16 %v500
    %v540 = vunpack.c.l.b16 %v501
    %v541 = vunpack.c.l.b16 %v502
    %v542 = vunpack.c.l.b16 %v503
    %v543 = vunpack.c.l.b16 %v504
    %v544 = vunpack.c.l.b16 %v505
    %v545 = vpack.c.b16 %v530, %v529
    %v546 = vpack.c.b16 %v532, %v531
    %v547 = vpack.c.b16 %v534, %v533
    %v548 = vpack.c.b16 %v536, %v535
    %v549 = vpack.c.b16 %v538, %v537
    %v550 = vpack.c.b16 %v540, %v539
    %v551 = vpack.c.b16 %v542, %v541
    %v552 = vpack.c.b16 %v544, %v543
    %561 = vmatprep.subr.bf16.mxu0 0
    %562 = vmatpush1.bf16.msra.mxu0 %v545
    %563 = vmatprep.subr.bf16.mxu0 0
    %564 = vmatpush1.bf16.msra.mxu0 %v546
    %565 = vmatprep.subr.bf16.mxu0 0
    %566 = vmatpush1.bf16.msra.mxu0 %v547
    %567 = vmatprep.subr.bf16.mxu0 0
    %568 = vmatpush1.bf16.msra.mxu0 %v548
    %569 = vmatprep.subr.bf16.mxu0 0
    %570 = vmatpush1.bf16.msra.mxu0 %v549
    %571 = vmatprep.subr.bf16.mxu0 0
    %572 = vmatpush1.bf16.msra.mxu0 %v550
    %573 = vmatprep.subr.bf16.mxu0 0
    %574 = vmatpush1.bf16.msra.mxu0 %v551
    %575 = vmatprep.subr.bf16.mxu0 0
    %576 = vmatpush1.bf16.msra.mxu0 %v552
    %577 = vmatprep.subr.bf16.mxu0 0
    %578 = vmatpush1.bf16.msra.mxu0 0
    %579 = vmatprep.subr.bf16.mxu0 0
    %580 = vmatpush1.bf16.msra.mxu0 0
    %581 = vmatprep.subr.bf16.mxu0 0
    %582 = vmatpush1.bf16.msra.mxu0 0
    %583 = vmatprep.subr.bf16.mxu0 0
    %584 = vmatpush1.bf16.msra.mxu0 0
    %585 = vmatprep.subr.bf16.mxu0 0
    %586 = vmatpush1.bf16.msra.mxu0 0
    %587 = vmatprep.subr.bf16.mxu0 0
    %588 = vmatpush1.bf16.msra.mxu0 0
    %589 = vmatprep.subr.bf16.mxu0 0
    %590 = vmatpush1.bf16.msra.mxu0 0
    %591 = vmatprep.subr.bf16.mxu0 0
    %592 = vmatpush1.bf16.msra.mxu0 0
    %593 = vmatprep.mubr.bf16.mxu0 0
    %594 = vmatmul.mubr.bf16.gmra.mrb[0].mxu0 %v489
    %v595 = vpop.f32.mrb[0].mxu0
    %v596 = vadd.f32 %v511, %v595
    %v597 = vpop.f32.mrb[0].mxu0
    %v598 = vpop.f32.mrb[0].mxu0
    %v599 = vadd.f32 %v511, %v598
    %v600 = vpop.f32.mrb[0].mxu0
    %601 = vdwg.mxu0
    %v602 = vld [vmem:[#allocation10] sm:$0xf]
    %v603 = vld [vmem:[#allocation10 + $0x4] sm:$0xf]
    %v604 = vld [vmem:[#allocation10 + $0x8] sm:$0xf]
    %v605 = vld [vmem:[#allocation10 + $0xc] sm:$0xf]
    %v606 = vld [vmem:[#allocation10 + $0x10] sm:$0xf]
    %v607 = vld [vmem:[#allocation10 + $0x14] sm:$0xf]
    %v608 = vld [vmem:[#allocation10 + $0x18] sm:$0xf]
    %v609 = vld [vmem:[#allocation10 + $0x1c] sm:$0xf]
    %v610 = vld [vmem:[#allocation10 + $0x20] sm:$0xf]
    %v611 = vld [vmem:[#allocation10 + $0x24] sm:$0xf]
    %v612 = vld [vmem:[#allocation10 + $0x28] sm:$0xf]
    %v613 = vld [vmem:[#allocation10 + $0x2c] sm:$0xf]
    %v614 = vld [vmem:[#allocation10 + $0x30] sm:$0xf]
    %v615 = vld [vmem:[#allocation10 + $0x34] sm:$0xf]
    %v616 = vld [vmem:[#allocation10 + $0x38] sm:$0xf]
    %v617 = vld [vmem:[#allocation10 + $0x3c] sm:$0xf]
    %v618 = vld [vmem:[%s8] sm:$0x1]
    %v620 = vlaneseq
    %v621 = vshrl.u32 %v620, 7
    %v622 = vsub.s32 0, %v621
    %v623 = vrot.slane %v618, %v622
    %v641 = vunpack.c.l.b16 %v602
    %v642 = vunpack.c.l.b16 %v603
    %v643 = vunpack.c.l.b16 %v604
    %v644 = vunpack.c.l.b16 %v605
    %v645 = vunpack.c.l.b16 %v606
    %v646 = vunpack.c.l.b16 %v607
    %v647 = vunpack.c.l.b16 %v608
    %v648 = vunpack.c.l.b16 %v609
    %v649 = vunpack.c.l.b16 %v610
    %v650 = vunpack.c.l.b16 %v611
    %v651 = vunpack.c.l.b16 %v612
    %v652 = vunpack.c.l.b16 %v613
    %v653 = vunpack.c.l.b16 %v614
    %v654 = vunpack.c.l.b16 %v615
    %v655 = vunpack.c.l.b16 %v616
    %v656 = vunpack.c.l.b16 %v617
    %v657 = vpack.c.b16 %v642, %v641
    %v658 = vpack.c.b16 %v644, %v643
    %v659 = vpack.c.b16 %v646, %v645
    %v660 = vpack.c.b16 %v648, %v647
    %v661 = vpack.c.b16 %v650, %v649
    %v662 = vpack.c.b16 %v652, %v651
    %v663 = vpack.c.b16 %v654, %v653
    %v664 = vpack.c.b16 %v656, %v655
    %673 = vmatprep.subr.bf16.mxu0 0
    %674 = vmatpush1.bf16.msra.mxu0 %v657
    %675 = vmatprep.subr.bf16.mxu0 0
    %676 = vmatpush1.bf16.msra.mxu0 %v658
    %677 = vmatprep.subr.bf16.mxu0 0
    %678 = vmatpush1.bf16.msra.mxu0 %v659
    %679 = vmatprep.subr.bf16.mxu0 0
    %680 = vmatpush1.bf16.msra.mxu0 %v660
    %681 = vmatprep.subr.bf16.mxu0 0
    %682 = vmatpush1.bf16.msra.mxu0 %v661
    %683 = vmatprep.subr.bf16.mxu0 0
    %684 = vmatpush1.bf16.msra.mxu0 %v662
    %685 = vmatprep.subr.bf16.mxu0 0
    %686 = vmatpush1.bf16.msra.mxu0 %v663
    %687 = vmatprep.subr.bf16.mxu0 0
    %688 = vmatpush1.bf16.msra.mxu0 %v664
    %689 = vmatprep.subr.bf16.mxu0 0
    %690 = vmatpush1.bf16.msra.mxu0 0
    %691 = vmatprep.subr.bf16.mxu0 0
    %692 = vmatpush1.bf16.msra.mxu0 0
    %693 = vmatprep.subr.bf16.mxu0 0
    %694 = vmatpush1.bf16.msra.mxu0 0
    %695 = vmatprep.subr.bf16.mxu0 0
    %696 = vmatpush1.bf16.msra.mxu0 0
    %697 = vmatprep.subr.bf16.mxu0 0
    %698 = vmatpush1.bf16.msra.mxu0 0
    %699 = vmatprep.subr.bf16.mxu0 0
    %700 = vmatpush1.bf16.msra.mxu0 0
    %701 = vmatprep.subr.bf16.mxu0 0
    %702 = vmatpush1.bf16.msra.mxu0 0
    %703 = vmatprep.subr.bf16.mxu0 0
    %704 = vmatpush1.bf16.msra.mxu0 0
    %705 = vmatprep.mubr.bf16.mxu0 0
    %706 = vmatmul.mubr.bf16.gmra.mrb[0].mxu0 %v372
    %v707 = vpop.f32.mrb[0].mxu0
    %v708 = vadd.f32 %v623, %v707
    %v709 = vpop.f32.mrb[0].mxu0
    %v710 = vpop.f32.mrb[0].mxu0
    %v711 = vadd.f32 %v623, %v710
    %v712 = vpop.f32.mrb[0].mxu0
    %713 = vdwg.mxu0
    %v714 = vmul.f32 %v708, %v596
    %v715 = vmul.f32 %v711, %v599
    %v716 = vpack.c.bf16 %v715, %v714
    %s717 = scalar_lea.vmem [#allocation5], 64
    %v718 = vld [vmem:[%s717] sm:$0xf]
    %v719 = vld [vmem:[%s717 + $0x4] sm:$0xf]
    %v720 = vld [vmem:[%s717 + $0x8] sm:$0xf]
    %v721 = vld [vmem:[%s717 + $0xc] sm:$0xf]
    %v722 = vld [vmem:[%s717 + $0x10] sm:$0xf]
    %v723 = vld [vmem:[%s717 + $0x14] sm:$0xf]
    %v724 = vld [vmem:[%s717 + $0x18] sm:$0xf]
    %v725 = vld [vmem:[%s717 + $0x1c] sm:$0xf]
    %v726 = vld [vmem:[%s717 + $0x20] sm:$0xf]
    %v727 = vld [vmem:[%s717 + $0x24] sm:$0xf]
    %v728 = vld [vmem:[%s717 + $0x28] sm:$0xf]
    %v729 = vld [vmem:[%s717 + $0x2c] sm:$0xf]
    %v730 = vld [vmem:[%s717 + $0x30] sm:$0xf]
    %v731 = vld [vmem:[%s717 + $0x34] sm:$0xf]
    %v732 = vld [vmem:[%s717 + $0x38] sm:$0xf]
    %v733 = vld [vmem:[%s717 + $0x3c] sm:$0xf]
    %s734 = scalar_lea.vmem %s2, 1
    %v735 = vld [vmem:[%s734] sm:$0x1]
    %v737 = vlaneseq
    %v738 = vshrl.u32 %v737, 7
    %v739 = vsub.s32 0, %v738
    %v740 = vrot.slane %v735, %v739
    %v758 = vunpack.c.l.b16 %v718
    %v759 = vunpack.c.l.b16 %v719
    %v760 = vunpack.c.l.b16 %v720
    %v761 = vunpack.c.l.b16 %v721
    %v762 = vunpack.c.l.b16 %v722
    %v763 = vunpack.c.l.b16 %v723
    %v764 = vunpack.c.l.b16 %v724
    %v765 = vunpack.c.l.b16 %v725
    %v766 = vunpack.c.l.b16 %v726
    %v767 = vunpack.c.l.b16 %v727
    %v768 = vunpack.c.l.b16 %v728
    %v769 = vunpack.c.l.b16 %v729
    %v770 = vunpack.c.l.b16 %v730
    %v771 = vunpack.c.l.b16 %v731
    %v772 = vunpack.c.l.b16 %v732
    %v773 = vunpack.c.l.b16 %v733
    %v774 = vpack.c.b16 %v759, %v758
    %v775 = vpack.c.b16 %v761, %v760
    %v776 = vpack.c.b16 %v763, %v762
    %v777 = vpack.c.b16 %v765, %v764
    %v778 = vpack.c.b16 %v767, %v766
    %v779 = vpack.c.b16 %v769, %v768
    %v780 = vpack.c.b16 %v771, %v770
    %v781 = vpack.c.b16 %v773, %v772
    %790 = vmatprep.subr.bf16.mxu0 0
    %791 = vmatpush1.bf16.msra.mxu0 %v774
    %792 = vmatprep.subr.bf16.mxu0 0
    %793 = vmatpush1.bf16.msra.mxu0 %v775
    %794 = vmatprep.subr.bf16.mxu0 0
    %795 = vmatpush1.bf16.msra.mxu0 %v776
    %796 = vmatprep.subr.bf16.mxu0 0
    %797 = vmatpush1.bf16.msra.mxu0 %v777
    %798 = vmatprep.subr.bf16.mxu0 0
    %799 = vmatpush1.bf16.msra.mxu0 %v778
    %800 = vmatprep.subr.bf16.mxu0 0
    %801 = vmatpush1.bf16.msra.mxu0 %v779
    %802 = vmatprep.subr.bf16.mxu0 0
    %803 = vmatpush1.bf16.msra.mxu0 %v780
    %804 = vmatprep.subr.bf16.mxu0 0
    %805 = vmatpush1.bf16.msra.mxu0 %v781
    %806 = vmatprep.subr.bf16.mxu0 0
    %807 = vmatpush1.bf16.msra.mxu0 0
    %808 = vmatprep.subr.bf16.mxu0 0
    %809 = vmatpush1.bf16.msra.mxu0 0
    %810 = vmatprep.subr.bf16.mxu0 0
    %811 = vmatpush1.bf16.msra.mxu0 0
    %812 = vmatprep.subr.bf16.mxu0 0
    %813 = vmatpush1.bf16.msra.mxu0 0
    %814 = vmatprep.subr.bf16.mxu0 0
    %815 = vmatpush1.bf16.msra.mxu0 0
    %816 = vmatprep.subr.bf16.mxu0 0
    %817 = vmatpush1.bf16.msra.mxu0 0
    %818 = vmatprep.subr.bf16.mxu0 0
    %819 = vmatpush1.bf16.msra.mxu0 0
    %820 = vmatprep.subr.bf16.mxu0 0
    %821 = vmatpush1.bf16.msra.mxu0 0
    %822 = vmatprep.mubr.bf16.mxu0 0
    %823 = vmatmul.mubr.bf16.gmra.mrb[0].mxu0 %v716
    %v824 = vpop.f32.mrb[0].mxu0
    %v825 = vadd.f32 %v740, %v824
    %v826 = vpop.f32.mrb[0].mxu0
    %v827 = vpop.f32.mrb[0].mxu0
    %v828 = vadd.f32 %v740, %v827
    %v829 = vpop.f32.mrb[0].mxu0
    %830 = vdwg.mxu0
    %v831 = vtanh.pop %v825
    %v832 = vtanh.pop %v828
    %v833 = vpack.c.bf16 %v832, %v831
    %s834 = scalar_lea.vmem [#allocation7], 64
    %v835 = vld [vmem:[%s834] sm:$0xf]
    %v836 = vld [vmem:[%s834 + $0x4] sm:$0xf]
    %v837 = vld [vmem:[%s834 + $0x8] sm:$0xf]
    %v838 = vld [vmem:[%s834 + $0xc] sm:$0xf]
    %v839 = vld [vmem:[%s834 + $0x10] sm:$0xf]
    %v840 = vld [vmem:[%s834 + $0x14] sm:$0xf]
    %v841 = vld [vmem:[%s834 + $0x18] sm:$0xf]
    %v842 = vld [vmem:[%s834 + $0x1c] sm:$0xf]
    %v843 = vld [vmem:[%s834 + $0x20] sm:$0xf]
    %v844 = vld [vmem:[%s834 + $0x24] sm:$0xf]
    %v845 = vld [vmem:[%s834 + $0x28] sm:$0xf]
    %v846 = vld [vmem:[%s834 + $0x2c] sm:$0xf]
    %v847 = vld [vmem:[%s834 + $0x30] sm:$0xf]
    %v848 = vld [vmem:[%s834 + $0x34] sm:$0xf]
    %v849 = vld [vmem:[%s834 + $0x38] sm:$0xf]
    %v850 = vld [vmem:[%s834 + $0x3c] sm:$0xf]
    %s851 = scalar_lea.vmem %s4, 1
    %v852 = vld [vmem:[%s851] sm:$0x1]
    %v854 = vlaneseq
    %v855 = vshrl.u32 %v854, 7
    %v856 = vsub.s32 0, %v855
    %v857 = vrot.slane %v852, %v856
    %v875 = vunpack.c.l.b16 %v835
    %v876 = vunpack.c.l.b16 %v836
    %v877 = vunpack.c.l.b16 %v837
    %v878 = vunpack.c.l.b16 %v838
    %v879 = vunpack.c.l.b16 %v839
    %v880 = vunpack.c.l.b16 %v840
    %v881 = vunpack.c.l.b16 %v841
    %v882 = vunpack.c.l.b16 %v842
    %v883 = vunpack.c.l.b16 %v843
    %v884 = vunpack.c.l.b16 %v844
    %v885 = vunpack.c.l.b16 %v845
    %v886 = vunpack.c.l.b16 %v846
    %v887 = vunpack.c.l.b16 %v847
    %v888 = vunpack.c.l.b16 %v848
    %v889 = vunpack.c.l.b16 %v849
    %v890 = vunpack.c.l.b16 %v850
    %v891 = vpack.c.b16 %v876, %v875
    %v892 = vpack.c.b16 %v878, %v877
    %v893 = vpack.c.b16 %v880, %v879
    %v894 = vpack.c.b16 %v882, %v881
    %v895 = vpack.c.b16 %v884, %v883
    %v896 = vpack.c.b16 %v886, %v885
    %v897 = vpack.c.b16 %v888, %v887
    %v898 = vpack.c.b16 %v890, %v889
    %907 = vmatprep.subr.bf16.mxu0 0
    %908 = vmatpush1.bf16.msra.mxu0 %v891
    %909 = vmatprep.subr.bf16.mxu0 0
    %910 = vmatpush1.bf16.msra.mxu0 %v892
    %911 = vmatprep.subr.bf16.mxu0 0
    %912 = vmatpush1.bf16.msra.mxu0 %v893
    %913 = vmatprep.subr.bf16.mxu0 0
    %914 = vmatpush1.bf16.msra.mxu0 %v894
    %915 = vmatprep.subr.bf16.mxu0 0
    %916 = vmatpush1.bf16.msra.mxu0 %v895
    %917 = vmatprep.subr.bf16.mxu0 0
    %918 = vmatpush1.bf16.msra.mxu0 %v896
    %919 = vmatprep.subr.bf16.mxu0 0
    %920 = vmatpush1.bf16.msra.mxu0 %v897
    %921 = vmatprep.subr.bf16.mxu0 0
    %922 = vmatpush1.bf16.msra.mxu0 %v898
    %923 = vmatprep.subr.bf16.mxu0 0
    %924 = vmatpush1.bf16.msra.mxu0 0
    %925 = vmatprep.subr.bf16.mxu0 0
    %926 = vmatpush1.bf16.msra.mxu0 0
    %927 = vmatprep.subr.bf16.mxu0 0
    %928 = vmatpush1.bf16.msra.mxu0 0
    %929 = vmatprep.subr.bf16.mxu0 0
    %930 = vmatpush1.bf16.msra.mxu0 0
    %931 = vmatprep.subr.bf16.mxu0 0
    %932 = vmatpush1.bf16.msra.mxu0 0
    %933 = vmatprep.subr.bf16.mxu0 0
    %934 = vmatpush1.bf16.msra.mxu0 0
    %935 = vmatprep.subr.bf16.mxu0 0
    %936 = vmatpush1.bf16.msra.mxu0 0
    %937 = vmatprep.subr.bf16.mxu0 0
    %938 = vmatpush1.bf16.msra.mxu0 0
    %939 = vmatprep.mubr.bf16.mxu0 0
    %940 = vmatmul.mubr.bf16.gmra.mrb[0].mxu0 %v833
    %v941 = vpop.f32.mrb[0].mxu0
    %v942 = vadd.f32 %v857, %v941
    %v943 = vpop.f32.mrb[0].mxu0
    %v944 = vpop.f32.mrb[0].mxu0
    %v945 = vadd.f32 %v857, %v944
    %v946 = vpop.f32.mrb[0].mxu0
    %947 = vdwg.mxu0
    %s948 = scalar_lea.vmem [#allocation10], 64
    %v949 = vld [vmem:[%s948] sm:$0xf]
    %v950 = vld [vmem:[%s948 + $0x4] sm:$0xf]
    %v951 = vld [vmem:[%s948 + $0x8] sm:$0xf]
    %v952 = vld [vmem:[%s948 + $0xc] sm:$0xf]
    %v953 = vld [vmem:[%s948 + $0x10] sm:$0xf]
    %v954 = vld [vmem:[%s948 + $0x14] sm:$0xf]
    %v955 = vld [vmem:[%s948 + $0x18] sm:$0xf]
    %v956 = vld [vmem:[%s948 + $0x1c] sm:$0xf]
    %v957 = vld [vmem:[%s948 + $0x20] sm:$0xf]
    %v958 = vld [vmem:[%s948 + $0x24] sm:$0xf]
    %v959 = vld [vmem:[%s948 + $0x28] sm:$0xf]
    %v960 = vld [vmem:[%s948 + $0x2c] sm:$0xf]
    %v961 = vld [vmem:[%s948 + $0x30] sm:$0xf]
    %v962 = vld [vmem:[%s948 + $0x34] sm:$0xf]
    %v963 = vld [vmem:[%s948 + $0x38] sm:$0xf]
    %v964 = vld [vmem:[%s948 + $0x3c] sm:$0xf]
    %s965 = scalar_lea.vmem %s8, 1
    %v966 = vld [vmem:[%s965] sm:$0x1]
    %v968 = vlaneseq
    %v969 = vshrl.u32 %v968, 7
    %v970 = vsub.s32 0, %v969
    %v971 = vrot.slane %v966, %v970
    %v989 = vunpack.c.l.b16 %v949
    %v990 = vunpack.c.l.b16 %v950
    %v991 = vunpack.c.l.b16 %v951
    %v992 = vunpack.c.l.b16 %v952
    %v993 = vunpack.c.l.b16 %v953
    %v994 = vunpack.c.l.b16 %v954
    %v995 = vunpack.c.l.b16 %v955
    %v996 = vunpack.c.l.b16 %v956
    %v997 = vunpack.c.l.b16 %v957
    %v998 = vunpack.c.l.b16 %v958
    %v999 = vunpack.c.l.b16 %v959
    %v1000 = vunpack.c.l.b16 %v960
    %v1001 = vunpack.c.l.b16 %v961
    %v1002 = vunpack.c.l.b16 %v962
    %v1003 = vunpack.c.l.b16 %v963
    %v1004 = vunpack.c.l.b16 %v964
    %v1005 = vpack.c.b16 %v990, %v989
    %v1006 = vpack.c.b16 %v992, %v991
    %v1007 = vpack.c.b16 %v994, %v993
    %v1008 = vpack.c.b16 %v996, %v995
    %v1009 = vpack.c.b16 %v998, %v997
    %v1010 = vpack.c.b16 %v1000, %v999
    %v1011 = vpack.c.b16 %v1002, %v1001
    %v1012 = vpack.c.b16 %v1004, %v1003
    %1021 = vmatprep.subr.bf16.mxu0 0
    %1022 = vmatpush1.bf16.msra.mxu0 %v1005
    %1023 = vmatprep.subr.bf16.mxu0 0
    %1024 = vmatpush1.bf16.msra.mxu0 %v1006
    %1025 = vmatprep.subr.bf16.mxu0 0
    %1026 = vmatpush1.bf16.msra.mxu0 %v1007
    %1027 = vmatprep.subr.bf16.mxu0 0
    %1028 = vmatpush1.bf16.msra.mxu0 %v1008
    %1029 = vmatprep.subr.bf16.mxu0 0
    %1030 = vmatpush1.bf16.msra.mxu0 %v1009
    %1031 = vmatprep.subr.bf16.mxu0 0
    %1032 = vmatpush1.bf16.msra.mxu0 %v1010
    %1033 = vmatprep.subr.bf16.mxu0 0
    %1034 = vmatpush1.bf16.msra.mxu0 %v1011
    %1035 = vmatprep.subr.bf16.mxu0 0
    %1036 = vmatpush1.bf16.msra.mxu0 %v1012
    %1037 = vmatprep.subr.bf16.mxu0 0
    %1038 = vmatpush1.bf16.msra.mxu0 0
    %1039 = vmatprep.subr.bf16.mxu0 0
    %1040 = vmatpush1.bf16.msra.mxu0 0
    %1041 = vmatprep.subr.bf16.mxu0 0
    %1042 = vmatpush1.bf16.msra.mxu0 0
    %1043 = vmatprep.subr.bf16.mxu0 0
    %1044 = vmatpush1.bf16.msra.mxu0 0
    %1045 = vmatprep.subr.bf16.mxu0 0
    %1046 = vmatpush1.bf16.msra.mxu0 0
    %1047 = vmatprep.subr.bf16.mxu0 0
    %1048 = vmatpush1.bf16.msra.mxu0 0
    %1049 = vmatprep.subr.bf16.mxu0 0
    %1050 = vmatpush1.bf16.msra.mxu0 0
    %1051 = vmatprep.subr.bf16.mxu0 0
    %1052 = vmatpush1.bf16.msra.mxu0 0
    %1053 = vmatprep.mubr.bf16.mxu0 0
    %1054 = vmatmul.mubr.bf16.gmra.mrb[0].mxu0 %v373
    %v1055 = vpop.f32.mrb[0].mxu0
    %v1056 = vadd.f32 %v971, %v1055
    %v1057 = vpop.f32.mrb[0].mxu0
    %v1058 = vpop.f32.mrb[0].mxu0
    %v1059 = vadd.f32 %v971, %v1058
    %v1060 = vpop.f32.mrb[0].mxu0
    %1061 = vdwg.mxu0
    %v1062 = vmul.f32 %v1056, %v942
    %v1063 = vmul.f32 %v1059, %v945
    %v1064 = vpack.c.bf16 %v1063, %v1062
    %s1065 = scalar_lea.vmem [#allocation5], 128
    %v1066 = vld [vmem:[%s1065] sm:$0xf]
    %v1067 = vld [vmem:[%s1065 + $0x4] sm:$0xf]
    %v1068 = vld [vmem:[%s1065 + $0x8] sm:$0xf]
    %v1069 = vld [vmem:[%s1065 + $0xc] sm:$0xf]
    %v1070 = vld [vmem:[%s1065 + $0x10] sm:$0xf]
    %v1071 = vld [vmem:[%s1065 + $0x14] sm:$0xf]
    %v1072 = vld [vmem:[%s1065 + $0x18] sm:$0xf]
    %v1073 = vld [vmem:[%s1065 + $0x1c] sm:$0xf]
    %v1074 = vld [vmem:[%s1065 + $0x20] sm:$0xf]
    %v1075 = vld [vmem:[%s1065 + $0x24] sm:$0xf]
    %v1076 = vld [vmem:[%s1065 + $0x28] sm:$0xf]
    %v1077 = vld [vmem:[%s1065 + $0x2c] sm:$0xf]
    %v1078 = vld [vmem:[%s1065 + $0x30] sm:$0xf]
    %v1079 = vld [vmem:[%s1065 + $0x34] sm:$0xf]
    %v1080 = vld [vmem:[%s1065 + $0x38] sm:$0xf]
    %v1081 = vld [vmem:[%s1065 + $0x3c] sm:$0xf]
    %s1082 = scalar_lea.vmem %s2, 2
    %v1083 = vld [vmem:[%s1082] sm:$0x1]
    %v1085 = vlaneseq
    %v1086 = vshrl.u32 %v1085, 7
    %v1087 = vsub.s32 0, %v1086
    %v1088 = vrot.slane %v1083, %v1087
    %v1106 = vunpack.c.l.b16 %v1066
    %v1107 = vunpack.c.l.b16 %v1067
    %v1108 = vunpack.c.l.b16 %v1068
    %v1109 = vunpack.c.l.b16 %v1069
    %v1110 = vunpack.c.l.b16 %v1070
    %v1111 = vunpack.c.l.b16 %v1071
    %v1112 = vunpack.c.l.b16 %v1072
    %v1113 = vunpack.c.l.b16 %v1073
    %v1114 = vunpack.c.l.b16 %v1074
    %v1115 = vunpack.c.l.b16 %v1075
    %v1116 = vunpack.c.l.b16 %v1076
    %v1117 = vunpack.c.l.b16 %v1077
    %v1118 = vunpack.c.l.b16 %v1078
    %v1119 = vunpack.c.l.b16 %v1079
    %v1120 = vunpack.c.l.b16 %v1080
    %v1121 = vunpack.c.l.b16 %v1081
    %v1122 = vpack.c.b16 %v1107, %v1106
    %v1123 = vpack.c.b16 %v1109, %v1108
    %v1124 = vpack.c.b16 %v1111, %v1110
    %v1125 = vpack.c.b16 %v1113, %v1112
    %v1126 = vpack.c.b16 %v1115, %v1114
    %v1127 = vpack.c.b16 %v1117, %v1116
    %v1128 = vpack.c.b16 %v1119, %v1118
    %v1129 = vpack.c.b16 %v1121, %v1120
    %1138 = vmatprep.subr.bf16.mxu0 0
    %1139 = vmatpush1.bf16.msra.mxu0 %v1122
    %1140 = vmatprep.subr.bf16.mxu0 0
    %1141 = vmatpush1.bf16.msra.mxu0 %v1123
    %1142 = vmatprep.subr.bf16.mxu0 0
    %1143 = vmatpush1.bf16.msra.mxu0 %v1124
    %1144 = vmatprep.subr.bf16.mxu0 0
    %1145 = vmatpush1.bf16.msra.mxu0 %v1125
    %1146 = vmatprep.subr.bf16.mxu0 0
    %1147 = vmatpush1.bf16.msra.mxu0 %v1126
    %1148 = vmatprep.subr.bf16.mxu0 0
    %1149 = vmatpush1.bf16.msra.mxu0 %v1127
    %1150 = vmatprep.subr.bf16.mxu0 0
    %1151 = vmatpush1.bf16.msra.mxu0 %v1128
    %1152 = vmatprep.subr.bf16.mxu0 0
    %1153 = vmatpush1.bf16.msra.mxu0 %v1129
    %1154 = vmatprep.subr.bf16.mxu0 0
    %1155 = vmatpush1.bf16.msra.mxu0 0
    %1156 = vmatprep.subr.bf16.mxu0 0
    %1157 = vmatpush1.bf16.msra.mxu0 0
    %1158 = vmatprep.subr.bf16.mxu0 0
    %1159 = vmatpush1.bf16.msra.mxu0 0
    %1160 = vmatprep.subr.bf16.mxu0 0
    %1161 = vmatpush1.bf16.msra.mxu0 0
    %1162 = vmatprep.subr.bf16.mxu0 0
    %1163 = vmatpush1.bf16.msra.mxu0 0
    %1164 = vmatprep.subr.bf16.mxu0 0
    %1165 = vmatpush1.bf16.msra.mxu0 0
    %1166 = vmatprep.subr.bf16.mxu0 0
    %1167 = vmatpush1.bf16.msra.mxu0 0
    %1168 = vmatprep.subr.bf16.mxu0 0
    %1169 = vmatpush1.bf16.msra.mxu0 0
    %1170 = vmatprep.mubr.bf16.mxu0 0
    %1171 = vmatmul.mubr.bf16.gmra.mrb[0].mxu0 %v1064
    %v1172 = vpop.f32.mrb[0].mxu0
    %v1173 = vadd.f32 %v1088, %v1172
    %v1174 = vpop.f32.mrb[0].mxu0
    %v1175 = vpop.f32.mrb[0].mxu0
    %v1176 = vadd.f32 %v1088, %v1175
    %v1177 = vpop.f32.mrb[0].mxu0
    %1178 = vdwg.mxu0
    %v1179 = vtanh.pop %v1173
    %v1180 = vtanh.pop %v1176
    %v1181 = vpack.c.bf16 %v1180, %v1179
    %s1182 = scalar_lea.vmem [#allocation7], 128
    %v1183 = vld [vmem:[%s1182] sm:$0xf]
    %v1184 = vld [vmem:[%s1182 + $0x4] sm:$0xf]
    %v1185 = vld [vmem:[%s1182 + $0x8] sm:$0xf]
    %v1186 = vld [vmem:[%s1182 + $0xc] sm:$0xf]
    %v1187 = vld [vmem:[%s1182 + $0x10] sm:$0xf]
    %v1188 = vld [vmem:[%s1182 + $0x14] sm:$0xf]
    %v1189 = vld [vmem:[%s1182 + $0x18] sm:$0xf]
    %v1190 = vld [vmem:[%s1182 + $0x1c] sm:$0xf]
    %v1191 = vld [vmem:[%s1182 + $0x20] sm:$0xf]
    %v1192 = vld [vmem:[%s1182 + $0x24] sm:$0xf]
    %v1193 = vld [vmem:[%s1182 + $0x28] sm:$0xf]
    %v1194 = vld [vmem:[%s1182 + $0x2c] sm:$0xf]
    %v1195 = vld [vmem:[%s1182 + $0x30] sm:$0xf]
    %v1196 = vld [vmem:[%s1182 + $0x34] sm:$0xf]
    %v1197 = vld [vmem:[%s1182 + $0x38] sm:$0xf]
    %v1198 = vld [vmem:[%s1182 + $0x3c] sm:$0xf]
    %s1199 = scalar_lea.vmem %s4, 2
    %v1200 = vld [vmem:[%s1199] sm:$0x1]
    %v1202 = vlaneseq
    %v1203 = vshrl.u32 %v1202, 7
    %v1204 = vsub.s32 0, %v1203
    %v1205 = vrot.slane %v1200, %v1204
    %v1223 = vunpack.c.l.b16 %v1183
    %v1224 = vunpack.c.l.b16 %v1184
    %v1225 = vunpack.c.l.b16 %v1185
    %v1226 = vunpack.c.l.b16 %v1186
    %v1227 = vunpack.c.l.b16 %v1187
    %v1228 = vunpack.c.l.b16 %v1188
    %v1229 = vunpack.c.l.b16 %v1189
    %v1230 = vunpack.c.l.b16 %v1190
    %v1231 = vunpack.c.l.b16 %v1191
    %v1232 = vunpack.c.l.b16 %v1192
    %v1233 = vunpack.c.l.b16 %v1193
    %v1234 = vunpack.c.l.b16 %v1194
    %v1235 = vunpack.c.l.b16 %v1195
    %v1236 = vunpack.c.l.b16 %v1196
    %v1237 = vunpack.c.l.b16 %v1197
    %v1238 = vunpack.c.l.b16 %v1198
    %v1239 = vpack.c.b16 %v1224, %v1223
    %v1240 = vpack.c.b16 %v1226, %v1225
    %v1241 = vpack.c.b16 %v1228, %v1227
    %v1242 = vpack.c.b16 %v1230, %v1229
    %v1243 = vpack.c.b16 %v1232, %v1231
    %v1244 = vpack.c.b16 %v1234, %v1233
    %v1245 = vpack.c.b16 %v1236, %v1235
    %v1246 = vpack.c.b16 %v1238, %v1237
    %1255 = vmatprep.subr.bf16.mxu0 0
    %1256 = vmatpush1.bf16.msra.mxu0 %v1239
    %1257 = vmatprep.subr.bf16.mxu0 0
    %1258 = vmatpush1.bf16.msra.mxu0 %v1240
    %1259 = vmatprep.subr.bf16.mxu0 0
    %1260 = vmatpush1.bf16.msra.mxu0 %v1241
    %1261 = vmatprep.subr.bf16.mxu0 0
    %1262 = vmatpush1.bf16.msra.mxu0 %v1242
    %1263 = vmatprep.subr.bf16.mxu0 0
    %1264 = vmatpush1.bf16.msra.mxu0 %v1243
    %1265 = vmatprep.subr.bf16.mxu0 0
    %1266 = vmatpush1.bf16.msra.mxu0 %v1244
    %1267 = vmatprep.subr.bf16.mxu0 0
    %1268 = vmatpush1.bf16.msra.mxu0 %v1245
    %1269 = vmatprep.subr.bf16.mxu0 0
    %1270 = vmatpush1.bf16.msra.mxu0 %v1246
    %1271 = vmatprep.subr.bf16.mxu0 0
    %1272 = vmatpush1.bf16.msra.mxu0 0
    %1273 = vmatprep.subr.bf16.mxu0 0
    %1274 = vmatpush1.bf16.msra.mxu0 0
    %1275 = vmatprep.subr.bf16.mxu0 0
    %1276 = vmatpush1.bf16.msra.mxu0 0
    %1277 = vmatprep.subr.bf16.mxu0 0
    %1278 = vmatpush1.bf16.msra.mxu0 0
    %1279 = vmatprep.subr.bf16.mxu0 0
    %1280 = vmatpush1.bf16.msra.mxu0 0
    %1281 = vmatprep.subr.bf16.mxu0 0
    %1282 = vmatpush1.bf16.msra.mxu0 0
    %1283 = vmatprep.subr.bf16.mxu0 0
    %1284 = vmatpush1.bf16.msra.mxu0 0
    %1285 = vmatprep.subr.bf16.mxu0 0
    %1286 = vmatpush1.bf16.msra.mxu0 0
    %1287 = vmatprep.mubr.bf16.mxu0 0
    %1288 = vmatmul.mubr.bf16.gmra.mrb[0].mxu0 %v1181
    %v1289 = vpop.f32.mrb[0].mxu0
    %v1290 = vadd.f32 %v1205, %v1289
    %v1291 = vpop.f32.mrb[0].mxu0
    %v1292 = vpop.f32.mrb[0].mxu0
    %v1293 = vadd.f32 %v1205, %v1292
    %v1294 = vpop.f32.mrb[0].mxu0
    %1295 = vdwg.mxu0
    %s1296 = scalar_lea.vmem [#allocation10], 128
    %v1297 = vld [vmem:[%s1296] sm:$0xf]
    %v1298 = vld [vmem:[%s1296 + $0x4] sm:$0xf]
    %v1299 = vld [vmem:[%s1296 + $0x8] sm:$0xf]
    %v1300 = vld [vmem:[%s1296 + $0xc] sm:$0xf]
    %v1301 = vld [vmem:[%s1296 + $0x10] sm:$0xf]
    %v1302 = vld [vmem:[%s1296 + $0x14] sm:$0xf]
    %v1303 = vld [vmem:[%s1296 + $0x18] sm:$0xf]
    %v1304 = vld [vmem:[%s1296 + $0x1c] sm:$0xf]
    %v1305 = vld [vmem:[%s1296 + $0x20] sm:$0xf]
    %v1306 = vld [vmem:[%s1296 + $0x24] sm:$0xf]
    %v1307 = vld [vmem:[%s1296 + $0x28] sm:$0xf]
    %v1308 = vld [vmem:[%s1296 + $0x2c] sm:$0xf]
    %v1309 = vld [vmem:[%s1296 + $0x30] sm:$0xf]
    %v1310 = vld [vmem:[%s1296 + $0x34] sm:$0xf]
    %v1311 = vld [vmem:[%s1296 + $0x38] sm:$0xf]
    %v1312 = vld [vmem:[%s1296 + $0x3c] sm:$0xf]
    %s1313 = scalar_lea.vmem %s8, 2
    %v1314 = vld [vmem:[%s1313] sm:$0x1]
    %v1316 = vlaneseq
    %v1317 = vshrl.u32 %v1316, 7
    %v1318 = vsub.s32 0, %v1317
    %v1319 = vrot.slane %v1314, %v1318
    %v1337 = vunpack.c.l.b16 %v1297
    %v1338 = vunpack.c.l.b16 %v1298
    %v1339 = vunpack.c.l.b16 %v1299
    %v1340 = vunpack.c.l.b16 %v1300
    %v1341 = vunpack.c.l.b16 %v1301
    %v1342 = vunpack.c.l.b16 %v1302
    %v1343 = vunpack.c.l.b16 %v1303
    %v1344 = vunpack.c.l.b16 %v1304
    %v1345 = vunpack.c.l.b16 %v1305
    %v1346 = vunpack.c.l.b16 %v1306
    %v1347 = vunpack.c.l.b16 %v1307
    %v1348 = vunpack.c.l.b16 %v1308
    %v1349 = vunpack.c.l.b16 %v1309
    %v1350 = vunpack.c.l.b16 %v1310
    %v1351 = vunpack.c.l.b16 %v1311
    %v1352 = vunpack.c.l.b16 %v1312
    %v1353 = vpack.c.b16 %v1338, %v1337
    %v1354 = vpack.c.b16 %v1340, %v1339
    %v1355 = vpack.c.b16 %v1342, %v1341
    %v1356 = vpack.c.b16 %v1344, %v1343
    %v1357 = vpack.c.b16 %v1346, %v1345
    %v1358 = vpack.c.b16 %v1348, %v1347
    %v1359 = vpack.c.b16 %v1350, %v1349
    %v1360 = vpack.c.b16 %v1352, %v1351
    %1369 = vmatprep.subr.bf16.mxu0 0
    %1370 = vmatpush1.bf16.msra.mxu0 %v1353
    %1371 = vmatprep.subr.bf16.mxu0 0
    %1372 = vmatpush1.bf16.msra.mxu0 %v1354
    %1373 = vmatprep.subr.bf16.mxu0 0
    %1374 = vmatpush1.bf16.msra.mxu0 %v1355
    %1375 = vmatprep.subr.bf16.mxu0 0
    %1376 = vmatpush1.bf16.msra.mxu0 %v1356
    %1377 = vmatprep.subr.bf16.mxu0 0
    %1378 = vmatpush1.bf16.msra.mxu0 %v1357
    %1379 = vmatprep.subr.bf16.mxu0 0
    %1380 = vmatpush1.bf16.msra.mxu0 %v1358
    %1381 = vmatprep.subr.bf16.mxu0 0
    %1382 = vmatpush1.bf16.msra.mxu0 %v1359
    %1383 = vmatprep.subr.bf16.mxu0 0
    %1384 = vmatpush1.bf16.msra.mxu0 %v1360
    %1385 = vmatprep.subr.bf16.mxu0 0
    %1386 = vmatpush1.bf16.msra.mxu0 0
    %1387 = vmatprep.subr.bf16.mxu0 0
    %1388 = vmatpush1.bf16.msra.mxu0 0
    %1389 = vmatprep.subr.bf16.mxu0 0
    %1390 = vmatpush1.bf16.msra.mxu0 0
    %1391 = vmatprep.subr.bf16.mxu0 0
    %1392 = vmatpush1.bf16.msra.mxu0 0
    %1393 = vmatprep.subr.bf16.mxu0 0
    %1394 = vmatpush1.bf16.msra.mxu0 0
    %1395 = vmatprep.subr.bf16.mxu0 0
    %1396 = vmatpush1.bf16.msra.mxu0 0
    %1397 = vmatprep.subr.bf16.mxu0 0
    %1398 = vmatpush1.bf16.msra.mxu0 0
    %1399 = vmatprep.subr.bf16.mxu0 0
    %1400 = vmatpush1.bf16.msra.mxu0 0
    %1401 = vmatprep.mubr.bf16.mxu0 0
    %1402 = vmatmul.mubr.bf16.gmra.mrb[0].mxu0 %v374
    %v1403 = vpop.f32.mrb[0].mxu0
    %v1404 = vadd.f32 %v1319, %v1403
    %v1405 = vpop.f32.mrb[0].mxu0
    %v1406 = vpop.f32.mrb[0].mxu0
    %v1407 = vadd.f32 %v1319, %v1406
    %v1408 = vpop.f32.mrb[0].mxu0
    %1409 = vdwg.mxu0
    %v1410 = vmul.f32 %v1404, %v1290
    %v1411 = vmul.f32 %v1407, %v1293
    %1412 = vadd.xlane.f32.xlu0 %v1410
    %v1413 = vpop.xlane.xlu0 %1412
    %1414 = vadd.xlane.f32.xlu0 %v1411
    %v1415 = vpop.xlane.xlu0 %1414
    %v1418 = vlaneseq
    %v1419 = vand.u32 %v1418, 127
    %v1420 = vlaneseq
    %v1421 = vshrl.u32 %v1420, 7
    %v1422 = vsub.s32 %v1419, %v1421
    %v1423 = vrot.slane %v1413, %v1422
    %v1424 = vadd.s32 %v1419, 4294967288
    %v1425 = vlaneseq
    %v1426 = vshrl.u32 %v1425, 7
    %v1427 = vsub.s32 %v1424, %v1426
    %v1428 = vrot.slane %v1415, %v1427
    %vm1429 = vcmask 130112
    %v1430 = vsel %vm1429, %v1428, %v1423
    %vm1432 = vcmask 122880
    %1433 = vst.msk [vmem:[#allocation11] sm:$0x1] %vm1432, %v1430
    // Predicated region
    $region58: #{tpu_custom_call.1} parent=1 // pred_check
      _
    $region59: #{tpu_custom_call.1} parent=1 // pred_check_branch
      %1435 = sbr.rel (0) target = $region61
    $region60: #{tpu_custom_call.1} parent=1 // pred_region
      %s1437 = ssub.s32 16, 16
      %1438 = vsyncadd [#allocation4], %s1437
      %s1440 = sshll.u32 [#allocation11], 4
      %s1441 = int_to_ptr.vmem [resolvable:$true] %s1440
      %1443 = dma.vmem_to_hbm [thread:$0]  %s1441, 16, %s9, [#allocation4]
    $region61: #{tpu_custom_call.1} parent=1 // pred_fallthru
      _
    // Predicated region
    $region62: #{tpu_custom_call.1} parent=1 // pred_check
      _
    $region63: #{tpu_custom_call.1} parent=1 // pred_check_branch
      %1445 = sbr.rel (0) target = $region65
    $region64: #{tpu_custom_call.1} parent=1 // pred_region
      %1446 = dma.done [#allocation4], 16
    $region65: #{tpu_custom_call.1} parent=1 // pred_fallthru
      _
    %1447 = vsyncpa [#allocation3], 1
    %1448 = vsyncpa [#allocation6], 1
    %1449 = vsyncpa [#allocation9], 1
    %1450 = vsyncpa [#allocation4], 1

</llo_original>
